<compile_context>
chip_gen: v7x
topology: tpu7x:2x2x1
jax: 0.10.0
libtpu: 0.0.40
codegen_flags: <defaults>
</compile_context>

<pallas_src>
import functools
import numpy as np
import jax
import jax.numpy as jnp
from jax.experimental import pallas as pl
from jax.experimental.pallas import tpu as pltpu


def pconv_stats_kernel(xp_ref, mp_ref, w_ref, out_ref, m01_ref, stats_ref,
                       *, K, dilation, Co):
    # xp_ref, mp_ref : (1, Hp, Wp, Cin)  zero-padded input / mask (one batch elem)
    # w_ref          : (K*K*2*Cin, Co_pad) packed weights; per tap t:
    #                    rows [t*2C, t*2C+C)    -> conv weights into cols [0, Co)
    #                    rows [t*2C+C, t*2C+2C) -> 1.0 into col Co (mask_conv)
    # out_ref        : (1, Ho, Wo, Co)   partial-conv output (pre-BN)
    # m01_ref        : (1, Ho, Wo, 1)    new_mask (channel-replicated -> 1 channel)
    # stats_ref      : (1, 2, Co_pad)    per-block [sum, sum-of-squares] for BN
    _, Hp, Wp, Cin = xp_ref.shape
    _, Ho, Wo, _ = out_ref.shape
    HW = Ho * Wo
    Co_pad = w_ref.shape[-1]

    x = xp_ref[0]
    m = mp_ref[0]
    xm = x * m                                   # hoisted: one multiply per element
    both = jnp.concatenate([xm, m], axis=-1)     # (Hp, Wp, 2*Cin)

    # im2col over the K*K dilated taps -> one MXU matmul instead of 9 tiny dots.
    taps = []
    for kh in range(K):
        for kw in range(K):
            hs, ws = kh * dilation, kw * dilation
            taps.append(both[hs:hs + Ho, ws:ws + Wo, :])
    patch = jnp.concatenate(taps, axis=-1).reshape(HW, K * K * 2 * Cin)

    # cols [0,Co): input_conv(x*m); col Co: mask_conv(mask); rest zero padding.
    res = jnp.dot(patch, w_ref[...], preferred_element_type=jnp.float32)  # (HW, Co_pad)

    msum = res[:, Co:Co + 1]                     # (HW, 1) mask sum (exact ints in f32)
    valid = (msum != 0.0).astype(jnp.float32)    # 1 - no_update_holes
    inv = pl.reciprocal(msum + (1.0 - valid), approx=False)  # holes -> 1/(0+1)=1
    out = res * inv * valid                      # lane-dense (Co_pad-wide) epilogue

    out_ref[...] = out[:, :Co].reshape(1, Ho, Wo, Co)
    m01_ref[...] = valid.reshape(1, Ho, Wo, 1)

    # Partial BatchNorm statistics for this block (finished in the wrapper).
    s = jnp.sum(out, axis=0, keepdims=True)            # (1, Co_pad)
    ss = jnp.sum(out * out, axis=0, keepdims=True)     # (1, Co_pad)
    stats_ref[...] = jnp.concatenate([s, ss], axis=0).reshape(1, 2, Co_pad)


def bn_relu_kernel(x_ref, scale_ref, shift_ref, o_ref):
    # Folded BatchNorm (y = x*scale + shift) + ReLU, elementwise per block.
    o_ref[...] = jnp.maximum(x_ref[...] * scale_ref[...] + shift_ref[...], 0.0)


def pcbactiv_forward(x_nchw, mask_nchw, w_oihw, gamma, beta,
                     *, dilation=3, padding=1, eps=1e-5):
    N, Cin, H, W = x_nchw.shape
    Co, _, K, _ = w_oihw.shape
    Ho = H + 2 * padding - dilation * (K - 1)
    Wo = W + 2 * padding - dilation * (K - 1)
    Hp, Wp = H + 2 * padding, W + 2 * padding
    KK = K * K
    Co_pad = -(-(Co + 1) // 128) * 128           # lane-dense padded out-channels

    # NCHW -> NHWC, zero-pad spatially (conv padding semantics).
    x = jnp.transpose(x_nchw, (0, 2, 3, 1)).astype(jnp.float32)
    m = jnp.transpose(mask_nchw, (0, 2, 3, 1)).astype(jnp.float32)
    xp = jnp.pad(x, ((0, 0), (padding, padding), (padding, padding), (0, 0)))
    mp = jnp.pad(m, ((0, 0), (padding, padding), (padding, padding), (0, 0)))

    # Packed weight (K*K*2*Cin, Co_pad): conv taps in cols [0,Co) and an
    # all-ones mask_conv column at col Co so the mask sum rides the same dot.
    w_taps = jnp.transpose(w_oihw.astype(jnp.float32), (2, 3, 1, 0)).reshape(KK, Cin, Co)
    conv_part = jnp.pad(w_taps, ((0, 0), (0, Cin), (0, Co_pad - Co)))
    ones_col = jnp.zeros((KK, 2 * Cin, Co_pad), jnp.float32).at[:, Cin:, Co].set(1.0)
    w_big = (conv_part + ones_col).reshape(KK * 2 * Cin, Co_pad)

    cparams = pltpu.CompilerParams(dimension_semantics=("parallel",),
                                   vmem_limit_bytes=32 * 1024 * 1024)

    kernel1 = functools.partial(pconv_stats_kernel, K=K, dilation=dilation, Co=Co)
    conv_out, mask01, stats = pl.pallas_call(
        kernel1,
        grid=(N,),
        in_specs=[
            pl.BlockSpec((1, Hp, Wp, Cin), lambda n: (n, 0, 0, 0)),
            pl.BlockSpec((1, Hp, Wp, Cin), lambda n: (n, 0, 0, 0)),
            pl.BlockSpec((KK * 2 * Cin, Co_pad), lambda n: (0, 0)),
        ],
        out_specs=(
            pl.BlockSpec((1, Ho, Wo, Co), lambda n: (n, 0, 0, 0)),
            pl.BlockSpec((1, Ho, Wo, 1), lambda n: (n, 0, 0, 0)),
            pl.BlockSpec((1, 2, Co_pad), lambda n: (n, 0, 0)),
        ),
        out_shape=(
            jax.ShapeDtypeStruct((N, Ho, Wo, Co), jnp.float32),
            jax.ShapeDtypeStruct((N, Ho, Wo, 1), jnp.float32),
            jax.ShapeDtypeStruct((N, 2, Co_pad), jnp.float32),
        ),
        compiler_params=cparams,
    )(xp, mp, w_big)

    # BatchNorm2d (training mode) batch statistics from per-block partial sums.
    cnt = float(N * Ho * Wo)
    ch_sum = jnp.sum(stats[:, 0, :Co], axis=0)
    ch_ssq = jnp.sum(stats[:, 1, :Co], axis=0)
    mean = ch_sum / cnt
    var = jnp.maximum(ch_ssq / cnt - mean * mean, 0.0)     # biased variance
    scale = gamma.astype(jnp.float32) * jax.lax.rsqrt(var + eps)
    shift = beta.astype(jnp.float32) - mean * scale

    h = pl.pallas_call(
        bn_relu_kernel,
        grid=(N,),
        in_specs=[
            pl.BlockSpec((1, Ho, Wo, Co), lambda n: (n, 0, 0, 0)),
            pl.BlockSpec((1, 1, 1, Co), lambda n: (0, 0, 0, 0)),
            pl.BlockSpec((1, 1, 1, Co), lambda n: (0, 0, 0, 0)),
        ],
        out_specs=pl.BlockSpec((1, Ho, Wo, Co), lambda n: (n, 0, 0, 0)),
        out_shape=jax.ShapeDtypeStruct((N, Ho, Wo, Co), jnp.float32),
        compiler_params=cparams,
    )(conv_out, scale.reshape(1, 1, 1, Co), shift.reshape(1, 1, 1, Co))

    # NHWC -> NCHW; new_mask is channel-replicated -> broadcast the 1-ch map.
    h_nchw = jnp.transpose(h, (0, 3, 1, 2))
    nm_nchw = jnp.broadcast_to(jnp.transpose(mask01, (0, 3, 1, 2)), (N, Co, Ho, Wo))
    return h_nchw, nm_nchw


def ref_forward_np(x, m, w, gamma, beta, *, K, dilation, padding, eps=1e-5):
    """float64 NumPy reference of PCBActiv.forward (NCHW)."""
    N, Cin, H, W = x.shape
    Co = w.shape[0]
    Ho = H + 2 * padding - dilation * (K - 1)
    Wo = W + 2 * padding - dilation * (K - 1)
    xp = np.pad(x * m, ((0, 0), (0, 0), (padding, padding), (padding, padding)))
    mp = np.pad(m, ((0, 0), (0, 0), (padding, padding), (padding, padding)))
    out = np.zeros((N, Co, Ho, Wo))
    msum = np.zeros((N, 1, Ho, Wo))
    for kh in range(K):
        for kw in range(K):
            hs, ws = kh * dilation, kw * dilation
            xs = xp[:, :, hs:hs + Ho, ws:ws + Wo]
            ms = mp[:, :, hs:hs + Ho, ws:ws + Wo]
            out += np.einsum('nchw,oc->nohw', xs, w[:, :, kh, kw])
            msum += ms.sum(axis=1, keepdims=True)
    holes = msum == 0
    msum_safe = np.where(holes, 1.0, msum)
    out = np.where(holes, 0.0, out / msum_safe)
    new_mask = np.where(holes, 0.0, 1.0) * np.ones_like(out)
    mean = out.mean(axis=(0, 2, 3), keepdims=True)
    var = ((out - mean) ** 2).mean(axis=(0, 2, 3), keepdims=True)
    h = (out - mean) / np.sqrt(var + eps) * gamma.reshape(1, -1, 1, 1) + beta.reshape(1, -1, 1, 1)
    return np.maximum(h, 0.0), new_mask


if __name__ == "__main__":
    key = jax.random.PRNGKey(0)
    k_w, k_x, k_m = jax.random.split(key, 3)

    N, Cin, Cout, H, W = 2, 4, 8, 16, 16
    K, dil, pad = 3, 3, 1

    # Deterministic "kaiming_normal_(fan_in, a=0)" init for input_conv; no bias.
    fan_in = Cin * K * K
    w_oihw = jax.random.normal(k_w, (Cout, Cin, K, K), jnp.float32) * np.sqrt(2.0 / fan_in)
    gamma = jnp.ones((Cout,), jnp.float32)   # BatchNorm weight init
    beta = jnp.zeros((Cout,), jnp.float32)   # BatchNorm bias init

    x = jax.random.normal(k_x, (N, Cin, H, W), jnp.float32)
    mask = (jax.random.uniform(k_m, (N, Cin, H, W)) > 0.3).astype(jnp.float32)
    mask = mask.at[:, :, :10, :10].set(0.0)  # guarantee some fully-masked receptive fields

    h, new_mask = pcbactiv_forward(x, mask, w_oihw, gamma, beta, dilation=dil, padding=pad)
    jax.block_until_ready((h, new_mask))

    h_ref, nm_ref = ref_forward_np(
        np.asarray(x, np.float64), np.asarray(mask, np.float64),
        np.asarray(w_oihw, np.float64), np.asarray(gamma, np.float64),
        np.asarray(beta, np.float64), K=K, dilation=dil, padding=pad)

    assert h.shape == (N, Cout, H - 4, W - 4) and new_mask.shape == h.shape
    err = float(np.max(np.abs(np.asarray(h, np.float64) - h_ref)))
    assert err < 1e-3, f"max abs err {err}"
    assert np.array_equal(np.asarray(new_mask), nm_ref.astype(np.float32))
    print("KERNEL_OK")
</pallas_src>

<mosaic_0001>
module attributes {stable_mosaic.version = 11 : i64} {
  func.func @pconv_stats_kernel(%arg0: i32, %arg1: memref<1x18x18x4xf32, #tpu.memory_space<vmem>>, %arg2: memref<1x18x18x4xf32, #tpu.memory_space<vmem>>, %arg3: memref<72x128xf32, #tpu.memory_space<vmem>>, %arg4: memref<1x12x12x8xf32, #tpu.memory_space<vmem>>, %arg5: memref<1x12x12x1xf32, #tpu.memory_space<vmem>>, %arg6: memref<1x2x128xf32, #tpu.memory_space<vmem>>) attributes {dimension_semantics = [#tpu.dimension_semantics<parallel>], iteration_bounds = array<i64: 2>, scalar_prefetch = 0 : i64, scratch_operands = 0 : i64, tpu.core_type = #tpu.core_type<tc>, window_params = [{transform_indices = @transform_0, window_bounds = array<i64: 1, 18, 18, 4>}, {transform_indices = @transform_1, window_bounds = array<i64: 1, 18, 18, 4>}, {pipeline_mode = #tpu.pipeline_mode<synchronous>, transform_indices = @transform_2, window_bounds = array<i64: 72, 128>}, {transform_indices = @transform_3, window_bounds = array<i64: 1, 12, 12, 8>}, {transform_indices = @transform_4, window_bounds = array<i64: 1, 12, 12, 1>}, {transform_indices = @transform_5, window_bounds = array<i64: 1, 2, 128>}]} {
    %c0 = arith.constant 0 : index
    %c0_0 = arith.constant 0 : index
    %c0_1 = arith.constant 0 : index
    %c0_2 = arith.constant 0 : index
    %0 = vector.load %arg1[%c0, %c0_0, %c0_1, %c0_2] : memref<1x18x18x4xf32, #tpu.memory_space<vmem>>, vector<1x18x18x4xf32>
    %1 = vector.shape_cast %0 : vector<1x18x18x4xf32> to vector<18x18x4xf32>
    %c0_3 = arith.constant 0 : index
    %c0_4 = arith.constant 0 : index
    %c0_5 = arith.constant 0 : index
    %c0_6 = arith.constant 0 : index
    %2 = vector.load %arg2[%c0_3, %c0_4, %c0_5, %c0_6] : memref<1x18x18x4xf32, #tpu.memory_space<vmem>>, vector<1x18x18x4xf32>
    %3 = vector.shape_cast %2 : vector<1x18x18x4xf32> to vector<18x18x4xf32>
    %4 = arith.mulf %1, %3 : vector<18x18x4xf32>
    %5 = tpu.concatenate %4, %3 in 2 : vector<18x18x4xf32>, vector<18x18x4xf32> -> vector<18x18x8xf32>
    %6 = vector.extract_strided_slice %5 {offsets = [0, 0, 0], sizes = [12, 12, 8], strides = [1, 1, 1]} : vector<18x18x8xf32> to vector<12x12x8xf32>
    %7 = vector.extract_strided_slice %5 {offsets = [0, 3, 0], sizes = [12, 12, 8], strides = [1, 1, 1]} : vector<18x18x8xf32> to vector<12x12x8xf32>
    %8 = vector.extract_strided_slice %5 {offsets = [0, 6, 0], sizes = [12, 12, 8], strides = [1, 1, 1]} : vector<18x18x8xf32> to vector<12x12x8xf32>
    %9 = vector.extract_strided_slice %5 {offsets = [3, 0, 0], sizes = [12, 12, 8], strides = [1, 1, 1]} : vector<18x18x8xf32> to vector<12x12x8xf32>
    %10 = vector.extract_strided_slice %5 {offsets = [3, 3, 0], sizes = [12, 12, 8], strides = [1, 1, 1]} : vector<18x18x8xf32> to vector<12x12x8xf32>
    %11 = vector.extract_strided_slice %5 {offsets = [3, 6, 0], sizes = [12, 12, 8], strides = [1, 1, 1]} : vector<18x18x8xf32> to vector<12x12x8xf32>
    %12 = vector.extract_strided_slice %5 {offsets = [6, 0, 0], sizes = [12, 12, 8], strides = [1, 1, 1]} : vector<18x18x8xf32> to vector<12x12x8xf32>
    %13 = vector.extract_strided_slice %5 {offsets = [6, 3, 0], sizes = [12, 12, 8], strides = [1, 1, 1]} : vector<18x18x8xf32> to vector<12x12x8xf32>
    %14 = vector.extract_strided_slice %5 {offsets = [6, 6, 0], sizes = [12, 12, 8], strides = [1, 1, 1]} : vector<18x18x8xf32> to vector<12x12x8xf32>
    %15 = tpu.concatenate %6, %7, %8, %9, %10, %11, %12, %13, %14 in 2 : vector<12x12x8xf32>, vector<12x12x8xf32>, vector<12x12x8xf32>, vector<12x12x8xf32>, vector<12x12x8xf32>, vector<12x12x8xf32>, vector<12x12x8xf32>, vector<12x12x8xf32>, vector<12x12x8xf32> -> vector<12x12x72xf32>
    %16 = vector.shape_cast %15 : vector<12x12x72xf32> to vector<144x72xf32>
    %c0_7 = arith.constant 0 : index
    %c0_8 = arith.constant 0 : index
    %17 = vector.load %arg3[%c0_7, %c0_8] : memref<72x128xf32, #tpu.memory_space<vmem>>, vector<72x128xf32>
    %cst = arith.constant dense<0.000000e+00> : vector<144x128xf32>
    %18 = tpu.matmul %16, %17, %cst {dimension_numbers = #tpu.dot_dimension_numbers<[1], [0], [0], [1], [0, 0, 1, 1], [], []>} : vector<144x72xf32>, vector<72x128xf32>, vector<144x128xf32> -> vector<144x128xf32>
    %19 = vector.extract_strided_slice %18 {offsets = [0, 8], sizes = [144, 1], strides = [1, 1]} : vector<144x128xf32> to vector<144x1xf32>
    %cst_9 = arith.constant 0.000000e+00 : f32
    %20 = vector.broadcast %cst_9 : f32 to vector<144x1xf32>
    %21 = arith.cmpf one, %19, %20 : vector<144x1xf32>
    %22 = arith.extui %21 : vector<144x1xi1> to vector<144x1xi32>
    %23 = arith.sitofp %22 : vector<144x1xi32> to vector<144x1xf32>
    %cst_10 = arith.constant 1.000000e+00 : f32
    %24 = vector.broadcast %cst_10 : f32 to vector<144x1xf32>
    %25 = arith.subf %24, %23 : vector<144x1xf32>
    %26 = arith.addf %19, %25 : vector<144x1xf32>
    %27 = tpu.reciprocal %26 : vector<144x1xf32> -> vector<144x1xf32>
    %28 = vector.broadcast %27 : vector<144x1xf32> to vector<144x128xf32>
    %29 = arith.mulf %18, %28 : vector<144x128xf32>
    %30 = vector.broadcast %23 : vector<144x1xf32> to vector<144x128xf32>
    %31 = arith.mulf %29, %30 : vector<144x128xf32>
    %32 = vector.extract_strided_slice %31 {offsets = [0, 0], sizes = [144, 8], strides = [1, 1]} : vector<144x128xf32> to vector<144x8xf32>
    %33 = vector.shape_cast %32 : vector<144x8xf32> to vector<1x12x12x8xf32>
    %c0_11 = arith.constant 0 : index
    %c0_12 = arith.constant 0 : index
    %c0_13 = arith.constant 0 : index
    %c0_14 = arith.constant 0 : index
    %34 = vector.load %arg4[%c0_11, %c0_12, %c0_13, %c0_14] : memref<1x12x12x8xf32, #tpu.memory_space<vmem>>, vector<1x12x12x8xf32>
    tpu.vector_store %arg4[%c0_11, %c0_12, %c0_13, %c0_14], %33 {strides = array<i32>} : memref<1x12x12x8xf32, #tpu.memory_space<vmem>>, vector<1x12x12x8xf32>,
    %35 = vector.shape_cast %23 : vector<144x1xf32> to vector<1x12x12x1xf32>
    %c0_15 = arith.constant 0 : index
    %c0_16 = arith.constant 0 : index
    %c0_17 = arith.constant 0 : index
    %c0_18 = arith.constant 0 : index
    %36 = vector.load %arg5[%c0_15, %c0_16, %c0_17, %c0_18] : memref<1x12x12x1xf32, #tpu.memory_space<vmem>>, vector<1x12x12x1xf32>
    tpu.vector_store %arg5[%c0_15, %c0_16, %c0_17, %c0_18], %35 {strides = array<i32>} : memref<1x12x12x1xf32, #tpu.memory_space<vmem>>, vector<1x12x12x1xf32>,
    %cst_19 = arith.constant dense<0.000000e+00> : vector<128xf32>
    %37 = vector.multi_reduction <add>, %31, %cst_19 [0] : vector<144x128xf32> to vector<128xf32>
    %38 = vector.shape_cast %37 : vector<128xf32> to vector<1x128xf32>
    %39 = arith.mulf %31, %31 : vector<144x128xf32>
    %cst_20 = arith.constant dense<0.000000e+00> : vector<128xf32>
    %40 = vector.multi_reduction <add>, %39, %cst_20 [0] : vector<144x128xf32> to vector<128xf32>
    %41 = vector.shape_cast %40 : vector<128xf32> to vector<1x128xf32>
    %42 = tpu.concatenate %38, %41 in 0 : vector<1x128xf32>, vector<1x128xf32> -> vector<2x128xf32>
    %43 = vector.shape_cast %42 : vector<2x128xf32> to vector<1x2x128xf32>
    %c0_21 = arith.constant 0 : index
    %c0_22 = arith.constant 0 : index
    %c0_23 = arith.constant 0 : index
    %44 = vector.load %arg6[%c0_21, %c0_22, %c0_23] : memref<1x2x128xf32, #tpu.memory_space<vmem>>, vector<1x2x128xf32>
    tpu.vector_store %arg6[%c0_21, %c0_22, %c0_23], %43 {strides = array<i32>} : memref<1x2x128xf32, #tpu.memory_space<vmem>>, vector<1x2x128xf32>,
    return
  }
  func.func @transform_0(%arg0: i32) -> (i32, i32, i32, i32) {
    %c0_i32 = arith.constant 0 : i32
    %c0_i32_0 = arith.constant 0 : i32
    %c0_i32_1 = arith.constant 0 : i32
    %c0_i32_2 = arith.constant 0 : i32
    return %arg0, %c0_i32, %c0_i32_0, %c0_i32_1 : i32, i32, i32, i32
  }
  func.func @transform_1(%arg0: i32) -> (i32, i32, i32, i32) {
    %c0_i32 = arith.constant 0 : i32
    %c0_i32_0 = arith.constant 0 : i32
    %c0_i32_1 = arith.constant 0 : i32
    %c0_i32_2 = arith.constant 0 : i32
    return %arg0, %c0_i32, %c0_i32_0, %c0_i32_1 : i32, i32, i32, i32
  }
  func.func @transform_2(%arg0: i32) -> (i32, i32) {
    %c0_i32 = arith.constant 0 : i32
    %c0_i32_0 = arith.constant 0 : i32
    %c0_i32_1 = arith.constant 0 : i32
    return %c0_i32, %c0_i32_0 : i32, i32
  }
  func.func @transform_3(%arg0: i32) -> (i32, i32, i32, i32) {
    %c0_i32 = arith.constant 0 : i32
    %c0_i32_0 = arith.constant 0 : i32
    %c0_i32_1 = arith.constant 0 : i32
    %c0_i32_2 = arith.constant 0 : i32
    return %arg0, %c0_i32, %c0_i32_0, %c0_i32_1 : i32, i32, i32, i32
  }
  func.func @transform_4(%arg0: i32) -> (i32, i32, i32, i32) {
    %c0_i32 = arith.constant 0 : i32
    %c0_i32_0 = arith.constant 0 : i32
    %c0_i32_1 = arith.constant 0 : i32
    %c0_i32_2 = arith.constant 0 : i32
    return %arg0, %c0_i32, %c0_i32_0, %c0_i32_1 : i32, i32, i32, i32
  }
  func.func @transform_5(%arg0: i32) -> (i32, i32, i32) {
    %c0_i32 = arith.constant 0 : i32
    %c0_i32_0 = arith.constant 0 : i32
    %c0_i32_1 = arith.constant 0 : i32
    return %arg0, %c0_i32, %c0_i32_0 : i32, i32, i32
  }
}

</mosaic_0001>

<llo_original>
// kernel: tpu_custom_call.1
$region0: #{tpu_custom_call.1}
  #allocation0 [shape = 'u32[]', space=smem, size = 0x4, offset = 0x4, fixed_abs, tag = 'smem constant byte address 0x4 - core index']
  #allocation1 [shape = 'u32[144,128]{1,0:T(1,128)}', space=vmem, size = 0x12000, scoped, tag = 'internal scratch']
  %s0 = inlined_call_operand.vmem [shape: f32[2,18,18,4], index: 0, kind: input, shape index: {}]
  %s1 = inlined_call_operand.vmem [shape: f32[2,18,18,4], index: 1, kind: input, shape index: {}]
  %s2 = inlined_call_operand.vmem [shape: f32[72,128], index: 2, kind: input, shape index: {}]
  %s3 = inlined_call_operand.vmem [shape: f32[2,12,12,8], index: 3, kind: output, shape index: {0}]
  %s4 = inlined_call_operand.vmem [shape: f32[2,12,12,1], index: 4, kind: output, shape index: {1}]
  %s5 = inlined_call_operand.hbm [shape: f32[2,2,128], index: 5, kind: output, shape index: {2}]
  %6 = xla_tuple %s3, %s4, %s5
  %s7 = sld [smem:[#allocation0]]
  $region61: #{tpu_custom_call.1} parent=0
    _
  %s9 = ssub.s32 1, %s7
  %s10 = scalar_select 0, %s9, %s7
  $region1: #{tpu_custom_call.1} parent=0
    #allocation2 [shape = 'u8[2048]{0}', space=vmem, size = 0x800, scoped, tag = 'output window, operand 2']
    #allocation3 [shape = 's32[2]{0}', space=sflag, size = 0x8, scoped, tag = 'scoped memory for tpu_custom_call.1']
    %11 = vsyncpa [#allocation3], 0
    %s12 = scalar_lea.sflag [#allocation3], 1
    %13 = vsyncpa %s12, 0
    loop: start=0, step=1, limit=4
    $region2: #{tpu_custom_call.1} parent=1 // loop_pre_header
      _
    $region3: #{tpu_custom_call.1} parent=1 // loop_header
      %s15 = sphi 0, %s19
      %p16 = scmp.ge.s32.totalorder %s15, 4
      %s25 = sphi 0, %s27
      %s28 = sphi 0, %s25
      %s29 = sphi 0, %s28
      %s45 = sphi 0, %s29
      %s51 = sphi 0, %s53
      %s54 = sphi 0, %s51
      %s55 = sphi 0, %s54
      %s71 = sphi 0, %s55
      %s75 = sphi 0, %s75
      %s77 = sphi 0, %s75
      %s78 = sphi 0, %s77
      %s92 = sphi 0, %s78
      %s98 = sphi 0, %s100
      %s101 = sphi 0, %s98
      %s102 = sphi 0, %s101
      %s118 = sphi 0, %s102
      %s124 = sphi 0, %s126
      %s127 = sphi 0, %s124
      %s128 = sphi 0, %s127
      %s144 = sphi 0, %s128
      %s150 = sphi 0, %s152
      %s153 = sphi 0, %s150
      %s154 = sphi 0, %s153
      %s170 = sphi 0, %s154
    $region4: #{tpu_custom_call.1} parent=1 // loop_header_branch
      %18 = sbr.rel (%p16) target = $region8
    $region5: #{tpu_custom_call.1} parent=1 // loop_body
      %s20 = ssub.s32 %s15, 1
      %s21 = ssub.s32 %s15, 2
      %s22 = sadd.s32 %s15, 1
      %s23 = ssub.s32 %s15, %s22
      %p24 = scmp.eq.s32.totalorder %s23, 0
      %s26 = sadd.s32 %s25, 1
      %s27 = scalar_select %p24, %s25, %s26
      %p30 = pneg %p24
      %p31 = scmp.eq.s32.totalorder %s15, 1
      %p32 = por %p30, %p31
      %p33 = scmp.ne.s32.totalorder %s25, %s28
      %p34 = scmp.eq.s32.totalorder %s15, 0
      %p35 = por %p33, %p34
      %p36 = scmp.ne.s32.totalorder %s25, %s28
      %p37 = scmp.eq.s32.totalorder %s20, 1
      %p38 = por %p36, %p37
      %p39 = scmp.ne.s32.totalorder %s28, %s29
      %p40 = scmp.eq.s32.totalorder %s20, 0
      %p41 = por %p39, %p40
      %p42 = scmp.ne.s32.totalorder %s28, %s29
      %p43 = scmp.eq.s32.totalorder %s21, 1
      %p44 = por %p42, %p43
      %p46 = scmp.ne.s32.totalorder %s29, %s45
      %p47 = scmp.eq.s32.totalorder %s21, 0
      %p48 = por %p46, %p47
      %s49 = ssub.s32 %s15, %s22
      %p50 = scmp.eq.s32.totalorder %s49, 0
      %s52 = sadd.s32 %s51, 1
      %s53 = scalar_select %p50, %s51, %s52
      %p56 = pneg %p50
      %p57 = scmp.eq.s32.totalorder %s15, 1
      %p58 = por %p56, %p57
      %p59 = scmp.ne.s32.totalorder %s51, %s54
      %p60 = scmp.eq.s32.totalorder %s15, 0
      %p61 = por %p59, %p60
      %p62 = scmp.ne.s32.totalorder %s51, %s54
      %p63 = scmp.eq.s32.totalorder %s20, 1
      %p64 = por %p62, %p63
      %p65 = scmp.ne.s32.totalorder %s54, %s55
      %p66 = scmp.eq.s32.totalorder %s20, 0
      %p67 = por %p65, %p66
      %p68 = scmp.ne.s32.totalorder %s54, %s55
      %p69 = scmp.eq.s32.totalorder %s21, 1
      %p70 = por %p68, %p69
      %p72 = scmp.ne.s32.totalorder %s55, %s71
      %p73 = scmp.eq.s32.totalorder %s21, 0
      %p74 = por %p72, %p73
      %s76 = sadd.s32 %s75, 1
      %p79 = scmp.eq.s32.totalorder %s15, 1
      %p80 = scmp.ne.s32.totalorder %s75, %s77
      %p81 = scmp.eq.s32.totalorder %s15, 0
      %p82 = por %p80, %p81
      %p83 = scmp.ne.s32.totalorder %s75, %s77
      %p84 = scmp.eq.s32.totalorder %s20, 1
      %p85 = por %p83, %p84
      %p86 = scmp.ne.s32.totalorder %s77, %s78
      %p87 = scmp.eq.s32.totalorder %s20, 0
      %p88 = por %p86, %p87
      %p89 = scmp.ne.s32.totalorder %s77, %s78
      %p90 = scmp.eq.s32.totalorder %s21, 1
      %p91 = por %p89, %p90
      %p93 = scmp.ne.s32.totalorder %s78, %s92
      %p94 = scmp.eq.s32.totalorder %s21, 0
      %p95 = por %p93, %p94
      %s96 = ssub.s32 %s15, %s22
      %p97 = scmp.eq.s32.totalorder %s96, 0
      %s99 = sadd.s32 %s98, 1
      %s100 = scalar_select %p97, %s98, %s99
      %p103 = pneg %p97
      %p104 = scmp.eq.s32.totalorder %s15, 1
      %p105 = por %p103, %p104
      %p106 = scmp.ne.s32.totalorder %s98, %s101
      %p107 = scmp.eq.s32.totalorder %s15, 0
      %p108 = por %p106, %p107
      %p109 = scmp.ne.s32.totalorder %s98, %s101
      %p110 = scmp.eq.s32.totalorder %s20, 1
      %p111 = por %p109, %p110
      %p112 = scmp.ne.s32.totalorder %s101, %s102
      %p113 = scmp.eq.s32.totalorder %s20, 0
      %p114 = por %p112, %p113
      %p115 = scmp.ne.s32.totalorder %s101, %s102
      %p116 = scmp.eq.s32.totalorder %s21, 1
      %p117 = por %p115, %p116
      %p119 = scmp.ne.s32.totalorder %s102, %s118
      %p120 = scmp.eq.s32.totalorder %s21, 0
      %p121 = por %p119, %p120
      %s122 = ssub.s32 %s15, %s22
      %p123 = scmp.eq.s32.totalorder %s122, 0
      %s125 = sadd.s32 %s124, 1
      %s126 = scalar_select %p123, %s124, %s125
      %p129 = pneg %p123
      %p130 = scmp.eq.s32.totalorder %s15, 1
      %p131 = por %p129, %p130
      %p132 = scmp.ne.s32.totalorder %s124, %s127
      %p133 = scmp.eq.s32.totalorder %s15, 0
      %p134 = por %p132, %p133
      %p135 = scmp.ne.s32.totalorder %s124, %s127
      %p136 = scmp.eq.s32.totalorder %s20, 1
      %p137 = por %p135, %p136
      %p138 = scmp.ne.s32.totalorder %s127, %s128
      %p139 = scmp.eq.s32.totalorder %s20, 0
      %p140 = por %p138, %p139
      %p141 = scmp.ne.s32.totalorder %s127, %s128
      %p142 = scmp.eq.s32.totalorder %s21, 1
      %p143 = por %p141, %p142
      %p145 = scmp.ne.s32.totalorder %s128, %s144
      %p146 = scmp.eq.s32.totalorder %s21, 0
      %p147 = por %p145, %p146
      %s148 = ssub.s32 %s15, %s22
      %p149 = scmp.eq.s32.totalorder %s148, 0
      %s151 = sadd.s32 %s150, 1
      %s152 = scalar_select %p149, %s150, %s151
      %p155 = pneg %p149
      %p156 = scmp.eq.s32.totalorder %s15, 1
      %p157 = por %p155, %p156
      %p158 = scmp.ne.s32.totalorder %s150, %s153
      %p159 = scmp.eq.s32.totalorder %s15, 0
      %p160 = por %p158, %p159
      %p161 = scmp.ne.s32.totalorder %s150, %s153
      %p162 = scmp.eq.s32.totalorder %s20, 1
      %p163 = por %p161, %p162
      %p164 = scmp.ne.s32.totalorder %s153, %s154
      %p165 = scmp.eq.s32.totalorder %s20, 0
      %p166 = por %p164, %p165
      %p167 = scmp.ne.s32.totalorder %s153, %s154
      %p168 = scmp.eq.s32.totalorder %s21, 1
      %p169 = por %p167, %p168
      %p171 = scmp.ne.s32.totalorder %s154, %s170
      %p172 = scmp.eq.s32.totalorder %s21, 0
      %p173 = por %p171, %p172
      %p174 = scmp.le.s32.totalorder 1, %s15
      %p175 = scmp.lt.s32.totalorder %s15, 3
      %p176 = pnand %p174, %p175
      %p177 = pneg %p176
      // Predicated region
      $region9: #{tpu_custom_call.1} parent=5 // pred_check
        _
      $region10: #{tpu_custom_call.1} parent=5 // pred_check_branch
        %179 = sbr.rel (%p176) target = $region12
      $region11: #{tpu_custom_call.1} parent=5 // pred_region
        %s180 = ssub.s32 %s15, 1
        // Predicated region
        $region13: #{tpu_custom_call.1} parent=11 // pred_check
          %p181 = pneg %p88
        $region14: #{tpu_custom_call.1} parent=11 // pred_check_branch
          %183 = sbr.rel (%p181) target = $region16
        $region15: #{tpu_custom_call.1} parent=11 // pred_region
          _
        $region16: #{tpu_custom_call.1} parent=11 // pred_fallthru
          _
      $region12: #{tpu_custom_call.1} parent=5 // pred_fallthru
        _
      %p184 = scmp.lt.s32.totalorder %s15, 2
      // Predicated region
      $region17: #{tpu_custom_call.1} parent=5 // pred_check
        %p185 = pneg %p184
      $region18: #{tpu_custom_call.1} parent=5 // pred_check_branch
        %187 = sbr.rel (%p185) target = $region20
      $region19: #{tpu_custom_call.1} parent=5 // pred_region
        // Predicated region
        $region21: #{tpu_custom_call.1} parent=19 // pred_check
          %p188 = pneg %p35
        $region22: #{tpu_custom_call.1} parent=19 // pred_check_branch
          %190 = sbr.rel (%p188) target = $region24
        $region23: #{tpu_custom_call.1} parent=19 // pred_region
          %p191 = scmp.lt.s32.totalorder %s15, 1
          %s192 = scalar_select %p191, %s15, 1
          %s193 = smul.addr %s192, 54
          %s194 = smul.addr %s193, 8
          %s195 = scalar_lea.vmem %s0, %s194
        $region24: #{tpu_custom_call.1} parent=19 // pred_fallthru
          _
        // Predicated region
        $region25: #{tpu_custom_call.1} parent=19 // pred_check
          %p196 = pneg %p61
        $region26: #{tpu_custom_call.1} parent=19 // pred_check_branch
          %198 = sbr.rel (%p196) target = $region28
        $region27: #{tpu_custom_call.1} parent=19 // pred_region
          %p199 = scmp.lt.s32.totalorder %s15, 1
          %s200 = scalar_select %p199, %s15, 1
          %s201 = smul.addr %s200, 54
          %s202 = smul.addr %s201, 8
          %s203 = scalar_lea.vmem %s1, %s202
        $region28: #{tpu_custom_call.1} parent=19 // pred_fallthru
          _
      $region20: #{tpu_custom_call.1} parent=5 // pred_fallthru
        _
      %p204 = scmp.le.s32.totalorder 1, %s15
      %p205 = scmp.lt.s32.totalorder %s15, 3
      %p206 = pnand %p204, %p205
      %p207 = pneg %p206
      // Predicated region
      $region29: #{tpu_custom_call.1} parent=5 // pred_check
        _
      $region30: #{tpu_custom_call.1} parent=5 // pred_check_branch
        %209 = sbr.rel (%p206) target = $region32
      $region31: #{tpu_custom_call.1} parent=5 // pred_region
        %s210 = ssub.s32 %s15, 1
        %p211 = scmp.lt.s32.totalorder %s20, 1
        %s212 = scalar_select %p211, %s20, 1
        %s213 = smul.addr %s212, 54
        %s214 = smul.addr %s213, 8
        %s215 = scalar_lea.vmem %s0, %s214
        %p216 = pneg %p41
        %p217 = pneg %p38
        %p218 = scmp.lt.s32.totalorder %s20, 1
        %s219 = scalar_select %p218, %s20, 1
        %s220 = smul.addr %s219, 54
        %s221 = smul.addr %s220, 8
        %s222 = scalar_lea.vmem %s1, %s221
        %p223 = pneg %p67
        %p224 = pneg %p64
        %p225 = pneg %p88
        %p226 = pneg %p85
        %p227 = pneg %p114
        %p228 = pneg %p111
        %p229 = scmp.lt.s32.totalorder %s20, 1
        %s230 = scalar_select %p229, %s20, 1
        %s231 = smul.addr %s230, 24
        %s232 = smul.addr %s231, 8
        %s233 = scalar_lea.vmem %s3, %s232
        %p234 = pneg %p140
        %p235 = pneg %p137
        %p236 = scmp.lt.s32.totalorder %s20, 1
        %s237 = scalar_select %p236, %s20, 1
        %s238 = smul.addr %s237, 24
        %s239 = smul.addr %s238, 8
        %s240 = scalar_lea.vmem %s4, %s239
        %p241 = pneg %p166
        %p242 = pneg %p163
        %s243 = sand.u32 %s153, 1
        %s244 = scalar_lea.sflag [#allocation3], %s243
        %s245 = sand.u32 %s153, 1
        %s246 = smul.addr %s245, 2
        %s247 = scalar_lea.vmem [#allocation2], %s246
        %p248 = scmp.lt.s32.totalorder %s20, 1
        %s249 = scalar_select %p248, %s20, 1
        %s250 = smul.addr %s249, 54
        %s251 = smul.addr %s250, 8
        %s252 = scalar_lea.vmem %s0, %s251
        %p253 = scmp.lt.s32.totalorder %s20, 1
        %s254 = scalar_select %p253, %s20, 1
        %s255 = smul.addr %s254, 54
        %s256 = smul.addr %s255, 8
        %s257 = scalar_lea.vmem %s1, %s256
        %p258 = scmp.lt.s32.totalorder %s20, 1
        %s259 = scalar_select %p258, %s20, 1
        %s260 = smul.addr %s259, 24
        %s261 = smul.addr %s260, 8
        %s262 = scalar_lea.vmem %s3, %s261
        %p263 = scmp.lt.s32.totalorder %s20, 1
        %s264 = scalar_select %p263, %s20, 1
        %s265 = smul.addr %s264, 24
        %s266 = smul.addr %s265, 8
        %s267 = scalar_lea.vmem %s4, %s266
        %v268 = vld [vmem:[%s252] sm:$0xff]
        %v269 = vld [vmem:[%s252 + $0x8] sm:$0xff]
        %v270 = vld [vmem:[%s252 + $0x10] sm:$0x3]
        %v271 = vld [vmem:[%s252 + $0x18] sm:$0xff]
        %v272 = vld [vmem:[%s252 + $0x20] sm:$0xff]
        %v273 = vld [vmem:[%s252 + $0x28] sm:$0x3]
        %v274 = vld [vmem:[%s252 + $0x30] sm:$0xff]
        %v275 = vld [vmem:[%s252 + $0x38] sm:$0xff]
        %v276 = vld [vmem:[%s252 + $0x40] sm:$0x3]
        %v277 = vld [vmem:[%s252 + $0x48] sm:$0xff]
        %v278 = vld [vmem:[%s252 + $0x50] sm:$0xff]
        %v279 = vld [vmem:[%s252 + $0x58] sm:$0x3]
        %v280 = vld [vmem:[%s252 + $0x60] sm:$0xff]
        %v281 = vld [vmem:[%s252 + $0x68] sm:$0xff]
        %v282 = vld [vmem:[%s252 + $0x70] sm:$0x3]
        %v283 = vld [vmem:[%s252 + $0x78] sm:$0xff]
        %v284 = vld [vmem:[%s252 + $0x80] sm:$0xff]
        %v285 = vld [vmem:[%s252 + $0x88] sm:$0x3]
        %v286 = vld [vmem:[%s252 + $0x90] sm:$0xff]
        %v287 = vld [vmem:[%s252 + $0x98] sm:$0xff]
        %v288 = vld [vmem:[%s252 + $0xa0] sm:$0x3]
        %v289 = vld [vmem:[%s252 + $0xa8] sm:$0xff]
        %v290 = vld [vmem:[%s252 + $0xb0] sm:$0xff]
        %v291 = vld [vmem:[%s252 + $0xb8] sm:$0x3]
        %v292 = vld [vmem:[%s252 + $0xc0] sm:$0xff]
        %v293 = vld [vmem:[%s252 + $0xc8] sm:$0xff]
        %v294 = vld [vmem:[%s252 + $0xd0] sm:$0x3]
        %v295 = vld [vmem:[%s252 + $0xd8] sm:$0xff]
        %v296 = vld [vmem:[%s252 + $0xe0] sm:$0xff]
        %v297 = vld [vmem:[%s252 + $0xe8] sm:$0x3]
        %v298 = vld [vmem:[%s252 + $0xf0] sm:$0xff]
        %v299 = vld [vmem:[%s252 + $0xf8] sm:$0xff]
        %v300 = vld [vmem:[%s252 + $0x100] sm:$0x3]
        %v301 = vld [vmem:[%s252 + $0x108] sm:$0xff]
        %v302 = vld [vmem:[%s252 + $0x110] sm:$0xff]
        %v303 = vld [vmem:[%s252 + $0x118] sm:$0x3]
        %v304 = vld [vmem:[%s252 + $0x120] sm:$0xff]
        %v305 = vld [vmem:[%s252 + $0x128] sm:$0xff]
        %v306 = vld [vmem:[%s252 + $0x130] sm:$0x3]
        %v307 = vld [vmem:[%s252 + $0x138] sm:$0xff]
        %v308 = vld [vmem:[%s252 + $0x140] sm:$0xff]
        %v309 = vld [vmem:[%s252 + $0x148] sm:$0x3]
        %v310 = vld [vmem:[%s252 + $0x150] sm:$0xff]
        %v311 = vld [vmem:[%s252 + $0x158] sm:$0xff]
        %v312 = vld [vmem:[%s252 + $0x160] sm:$0x3]
        %v313 = vld [vmem:[%s252 + $0x168] sm:$0xff]
        %v314 = vld [vmem:[%s252 + $0x170] sm:$0xff]
        %v315 = vld [vmem:[%s252 + $0x178] sm:$0x3]
        %v316 = vld [vmem:[%s252 + $0x180] sm:$0xff]
        %v317 = vld [vmem:[%s252 + $0x188] sm:$0xff]
        %v318 = vld [vmem:[%s252 + $0x190] sm:$0x3]
        %v319 = vld [vmem:[%s252 + $0x198] sm:$0xff]
        %v320 = vld [vmem:[%s252 + $0x1a0] sm:$0xff]
        %v321 = vld [vmem:[%s252 + $0x1a8] sm:$0x3]
        %v322 = vld [vmem:[%s257] sm:$0xff]
        %v323 = vld [vmem:[%s257 + $0x8] sm:$0xff]
        %v324 = vld [vmem:[%s257 + $0x10] sm:$0x3]
        %v325 = vld [vmem:[%s257 + $0x18] sm:$0xff]
        %v326 = vld [vmem:[%s257 + $0x20] sm:$0xff]
        %v327 = vld [vmem:[%s257 + $0x28] sm:$0x3]
        %v328 = vld [vmem:[%s257 + $0x30] sm:$0xff]
        %v329 = vld [vmem:[%s257 + $0x38] sm:$0xff]
        %v330 = vld [vmem:[%s257 + $0x40] sm:$0x3]
        %v331 = vld [vmem:[%s257 + $0x48] sm:$0xff]
        %v332 = vld [vmem:[%s257 + $0x50] sm:$0xff]
        %v333 = vld [vmem:[%s257 + $0x58] sm:$0x3]
        %v334 = vld [vmem:[%s257 + $0x60] sm:$0xff]
        %v335 = vld [vmem:[%s257 + $0x68] sm:$0xff]
        %v336 = vld [vmem:[%s257 + $0x70] sm:$0x3]
        %v337 = vld [vmem:[%s257 + $0x78] sm:$0xff]
        %v338 = vld [vmem:[%s257 + $0x80] sm:$0xff]
        %v339 = vld [vmem:[%s257 + $0x88] sm:$0x3]
        %v340 = vld [vmem:[%s257 + $0x90] sm:$0xff]
        %v341 = vld [vmem:[%s257 + $0x98] sm:$0xff]
        %v342 = vld [vmem:[%s257 + $0xa0] sm:$0x3]
        %v343 = vld [vmem:[%s257 + $0xa8] sm:$0xff]
        %v344 = vld [vmem:[%s257 + $0xb0] sm:$0xff]
        %v345 = vld [vmem:[%s257 + $0xb8] sm:$0x3]
        %v346 = vld [vmem:[%s257 + $0xc0] sm:$0xff]
        %v347 = vld [vmem:[%s257 + $0xc8] sm:$0xff]
        %v348 = vld [vmem:[%s257 + $0xd0] sm:$0x3]
        %v349 = vld [vmem:[%s257 + $0xd8] sm:$0xff]
        %v350 = vld [vmem:[%s257 + $0xe0] sm:$0xff]
        %v351 = vld [vmem:[%s257 + $0xe8] sm:$0x3]
        %v352 = vld [vmem:[%s257 + $0xf0] sm:$0xff]
        %v353 = vld [vmem:[%s257 + $0xf8] sm:$0xff]
        %v354 = vld [vmem:[%s257 + $0x100] sm:$0x3]
        %v355 = vld [vmem:[%s257 + $0x108] sm:$0xff]
        %v356 = vld [vmem:[%s257 + $0x110] sm:$0xff]
        %v357 = vld [vmem:[%s257 + $0x118] sm:$0x3]
        %v358 = vld [vmem:[%s257 + $0x120] sm:$0xff]
        %v359 = vld [vmem:[%s257 + $0x128] sm:$0xff]
        %v360 = vld [vmem:[%s257 + $0x130] sm:$0x3]
        %v361 = vld [vmem:[%s257 + $0x138] sm:$0xff]
        %v362 = vld [vmem:[%s257 + $0x140] sm:$0xff]
        %v363 = vld [vmem:[%s257 + $0x148] sm:$0x3]
        %v364 = vld [vmem:[%s257 + $0x150] sm:$0xff]
        %v365 = vld [vmem:[%s257 + $0x158] sm:$0xff]
        %v366 = vld [vmem:[%s257 + $0x160] sm:$0x3]
        %v367 = vld [vmem:[%s257 + $0x168] sm:$0xff]
        %v368 = vld [vmem:[%s257 + $0x170] sm:$0xff]
        %v369 = vld [vmem:[%s257 + $0x178] sm:$0x3]
        %v370 = vld [vmem:[%s257 + $0x180] sm:$0xff]
        %v371 = vld [vmem:[%s257 + $0x188] sm:$0xff]
        %v372 = vld [vmem:[%s257 + $0x190] sm:$0x3]
        %v373 = vld [vmem:[%s257 + $0x198] sm:$0xff]
        %v374 = vld [vmem:[%s257 + $0x1a0] sm:$0xff]
        %v375 = vld [vmem:[%s257 + $0x1a8] sm:$0x3]
        %v376 = vmul.f32 %v268, %v322
        %v377 = vmul.f32 %v269, %v323
        %v378 = vmul.f32 %v270, %v324
        %v379 = vmul.f32 %v271, %v325
        %v380 = vmul.f32 %v272, %v326
        %v381 = vmul.f32 %v273, %v327
        %v382 = vmul.f32 %v274, %v328
        %v383 = vmul.f32 %v275, %v329
        %v384 = vmul.f32 %v276, %v330
        %v385 = vmul.f32 %v277, %v331
        %v386 = vmul.f32 %v278, %v332
        %v387 = vmul.f32 %v279, %v333
        %v388 = vmul.f32 %v280, %v334
        %v389 = vmul.f32 %v281, %v335
        %v390 = vmul.f32 %v282, %v336
        %v391 = vmul.f32 %v283, %v337
        %v392 = vmul.f32 %v284, %v338
        %v393 = vmul.f32 %v285, %v339
        %v394 = vmul.f32 %v286, %v340
        %v395 = vmul.f32 %v287, %v341
        %v396 = vmul.f32 %v288, %v342
        %v397 = vmul.f32 %v289, %v343
        %v398 = vmul.f32 %v290, %v344
        %v399 = vmul.f32 %v291, %v345
        %v400 = vmul.f32 %v292, %v346
        %v401 = vmul.f32 %v293, %v347
        %v402 = vmul.f32 %v294, %v348
        %v403 = vmul.f32 %v295, %v349
        %v404 = vmul.f32 %v296, %v350
        %v405 = vmul.f32 %v297, %v351
        %v406 = vmul.f32 %v298, %v352
        %v407 = vmul.f32 %v299, %v353
        %v408 = vmul.f32 %v300, %v354
        %v409 = vmul.f32 %v301, %v355
        %v410 = vmul.f32 %v302, %v356
        %v411 = vmul.f32 %v303, %v357
        %v412 = vmul.f32 %v304, %v358
        %v413 = vmul.f32 %v305, %v359
        %v414 = vmul.f32 %v306, %v360
        %v415 = vmul.f32 %v307, %v361
        %v416 = vmul.f32 %v308, %v362
        %v417 = vmul.f32 %v309, %v363
        %v418 = vmul.f32 %v310, %v364
        %v419 = vmul.f32 %v311, %v365
        %v420 = vmul.f32 %v312, %v366
        %v421 = vmul.f32 %v313, %v367
        %v422 = vmul.f32 %v314, %v368
        %v423 = vmul.f32 %v315, %v369
        %v424 = vmul.f32 %v316, %v370
        %v425 = vmul.f32 %v317, %v371
        %v426 = vmul.f32 %v318, %v372
        %v427 = vmul.f32 %v319, %v373
        %v428 = vmul.f32 %v320, %v374
        %v429 = vmul.f32 %v321, %v375
        %484 = vrot.lane.b32.xlu0 %v322, 4
        %v485 = vpop.permute.xlu0 %484
        %486 = vrot.lane.b32.xlu0 %v323, 4
        %v487 = vpop.permute.xlu0 %486
        %488 = vrot.lane.b32.xlu0 %v324, 4
        %v489 = vpop.permute.xlu0 %488
        %490 = vrot.lane.b32.xlu0 %v325, 4
        %v491 = vpop.permute.xlu0 %490
        %492 = vrot.lane.b32.xlu0 %v326, 4
        %v493 = vpop.permute.xlu0 %492
        %494 = vrot.lane.b32.xlu0 %v327, 4
        %v495 = vpop.permute.xlu0 %494
        %496 = vrot.lane.b32.xlu0 %v328, 4
        %v497 = vpop.permute.xlu0 %496
        %498 = vrot.lane.b32.xlu0 %v329, 4
        %v499 = vpop.permute.xlu0 %498
        %500 = vrot.lane.b32.xlu0 %v330, 4
        %v501 = vpop.permute.xlu0 %500
        %502 = vrot.lane.b32.xlu0 %v331, 4
        %v503 = vpop.permute.xlu0 %502
        %504 = vrot.lane.b32.xlu0 %v332, 4
        %v505 = vpop.permute.xlu0 %504
        %506 = vrot.lane.b32.xlu0 %v333, 4
        %v507 = vpop.permute.xlu0 %506
        %508 = vrot.lane.b32.xlu0 %v334, 4
        %v509 = vpop.permute.xlu0 %508
        %510 = vrot.lane.b32.xlu0 %v335, 4
        %v511 = vpop.permute.xlu0 %510
        %512 = vrot.lane.b32.xlu0 %v336, 4
        %v513 = vpop.permute.xlu0 %512
        %514 = vrot.lane.b32.xlu0 %v337, 4
        %v515 = vpop.permute.xlu0 %514
        %516 = vrot.lane.b32.xlu0 %v338, 4
        %v517 = vpop.permute.xlu0 %516
        %518 = vrot.lane.b32.xlu0 %v339, 4
        %v519 = vpop.permute.xlu0 %518
        %520 = vrot.lane.b32.xlu0 %v340, 4
        %v521 = vpop.permute.xlu0 %520
        %522 = vrot.lane.b32.xlu0 %v341, 4
        %v523 = vpop.permute.xlu0 %522
        %524 = vrot.lane.b32.xlu0 %v342, 4
        %v525 = vpop.permute.xlu0 %524
        %526 = vrot.lane.b32.xlu0 %v343, 4
        %v527 = vpop.permute.xlu0 %526
        %528 = vrot.lane.b32.xlu0 %v344, 4
        %v529 = vpop.permute.xlu0 %528
        %530 = vrot.lane.b32.xlu0 %v345, 4
        %v531 = vpop.permute.xlu0 %530
        %532 = vrot.lane.b32.xlu0 %v346, 4
        %v533 = vpop.permute.xlu0 %532
        %534 = vrot.lane.b32.xlu0 %v347, 4
        %v535 = vpop.permute.xlu0 %534
        %536 = vrot.lane.b32.xlu0 %v348, 4
        %v537 = vpop.permute.xlu0 %536
        %538 = vrot.lane.b32.xlu0 %v349, 4
        %v539 = vpop.permute.xlu0 %538
        %540 = vrot.lane.b32.xlu0 %v350, 4
        %v541 = vpop.permute.xlu0 %540
        %542 = vrot.lane.b32.xlu0 %v351, 4
        %v543 = vpop.permute.xlu0 %542
        %544 = vrot.lane.b32.xlu0 %v352, 4
        %v545 = vpop.permute.xlu0 %544
        %546 = vrot.lane.b32.xlu0 %v353, 4
        %v547 = vpop.permute.xlu0 %546
        %548 = vrot.lane.b32.xlu0 %v354, 4
        %v549 = vpop.permute.xlu0 %548
        %550 = vrot.lane.b32.xlu0 %v355, 4
        %v551 = vpop.permute.xlu0 %550
        %552 = vrot.lane.b32.xlu0 %v356, 4
        %v553 = vpop.permute.xlu0 %552
        %554 = vrot.lane.b32.xlu0 %v357, 4
        %v555 = vpop.permute.xlu0 %554
        %556 = vrot.lane.b32.xlu0 %v358, 4
        %v557 = vpop.permute.xlu0 %556
        %558 = vrot.lane.b32.xlu0 %v359, 4
        %v559 = vpop.permute.xlu0 %558
        %560 = vrot.lane.b32.xlu0 %v360, 4
        %v561 = vpop.permute.xlu0 %560
        %562 = vrot.lane.b32.xlu0 %v361, 4
        %v563 = vpop.permute.xlu0 %562
        %564 = vrot.lane.b32.xlu0 %v362, 4
        %v565 = vpop.permute.xlu0 %564
        %566 = vrot.lane.b32.xlu0 %v363, 4
        %v567 = vpop.permute.xlu0 %566
        %568 = vrot.lane.b32.xlu0 %v364, 4
        %v569 = vpop.permute.xlu0 %568
        %570 = vrot.lane.b32.xlu0 %v365, 4
        %v571 = vpop.permute.xlu0 %570
        %572 = vrot.lane.b32.xlu0 %v366, 4
        %v573 = vpop.permute.xlu0 %572
        %574 = vrot.lane.b32.xlu0 %v367, 4
        %v575 = vpop.permute.xlu0 %574
        %576 = vrot.lane.b32.xlu0 %v368, 4
        %v577 = vpop.permute.xlu0 %576
        %578 = vrot.lane.b32.xlu0 %v369, 4
        %v579 = vpop.permute.xlu0 %578
        %580 = vrot.lane.b32.xlu0 %v370, 4
        %v581 = vpop.permute.xlu0 %580
        %582 = vrot.lane.b32.xlu0 %v371, 4
        %v583 = vpop.permute.xlu0 %582
        %584 = vrot.lane.b32.xlu0 %v372, 4
        %v585 = vpop.permute.xlu0 %584
        %586 = vrot.lane.b32.xlu0 %v373, 4
        %v587 = vpop.permute.xlu0 %586
        %588 = vrot.lane.b32.xlu0 %v374, 4
        %v589 = vpop.permute.xlu0 %588
        %590 = vrot.lane.b32.xlu0 %v375, 4
        %v591 = vpop.permute.xlu0 %590
        %vm646 = vcmask 31744
        %v647 = vsel %vm646, %v376, %v485
        %v648 = vsel %vm646, %v377, %v487
        %v649 = vsel %vm646, %v378, %v489
        %v650 = vsel %vm646, %v379, %v491
        %v651 = vsel %vm646, %v380, %v493
        %v652 = vsel %vm646, %v381, %v495
        %v653 = vsel %vm646, %v382, %v497
        %v654 = vsel %vm646, %v383, %v499
        %v655 = vsel %vm646, %v384, %v501
        %v656 = vsel %vm646, %v385, %v503
        %v657 = vsel %vm646, %v386, %v505
        %v658 = vsel %vm646, %v387, %v507
        %v659 = vsel %vm646, %v388, %v509
        %v660 = vsel %vm646, %v389, %v511
        %v661 = vsel %vm646, %v390, %v513
        %v662 = vsel %vm646, %v391, %v515
        %v663 = vsel %vm646, %v392, %v517
        %v664 = vsel %vm646, %v393, %v519
        %v665 = vsel %vm646, %v394, %v521
        %v666 = vsel %vm646, %v395, %v523
        %v667 = vsel %vm646, %v396, %v525
        %v668 = vsel %vm646, %v397, %v527
        %v669 = vsel %vm646, %v398, %v529
        %v670 = vsel %vm646, %v399, %v531
        %v671 = vsel %vm646, %v400, %v533
        %v672 = vsel %vm646, %v401, %v535
        %v673 = vsel %vm646, %v402, %v537
        %v674 = vsel %vm646, %v403, %v539
        %v675 = vsel %vm646, %v404, %v541
        %v676 = vsel %vm646, %v405, %v543
        %v677 = vsel %vm646, %v406, %v545
        %v678 = vsel %vm646, %v407, %v547
        %v679 = vsel %vm646, %v408, %v549
        %v680 = vsel %vm646, %v409, %v551
        %v681 = vsel %vm646, %v410, %v553
        %v682 = vsel %vm646, %v411, %v555
        %v683 = vsel %vm646, %v412, %v557
        %v684 = vsel %vm646, %v413, %v559
        %v685 = vsel %vm646, %v414, %v561
        %v686 = vsel %vm646, %v415, %v563
        %v687 = vsel %vm646, %v416, %v565
        %v688 = vsel %vm646, %v417, %v567
        %v689 = vsel %vm646, %v418, %v569
        %v690 = vsel %vm646, %v419, %v571
        %v691 = vsel %vm646, %v420, %v573
        %v692 = vsel %vm646, %v421, %v575
        %v693 = vsel %vm646, %v422, %v577
        %v694 = vsel %vm646, %v423, %v579
        %v695 = vsel %vm646, %v424, %v581
        %v696 = vsel %vm646, %v425, %v583
        %v697 = vsel %vm646, %v426, %v585
        %v698 = vsel %vm646, %v427, %v587
        %v699 = vsel %vm646, %v428, %v589
        %v700 = vsel %vm646, %v429, %v591
        %vm725 = vcmask 1044480
        %v726 = vrot.slane %v647, 3
        %v727 = vrot.slane %v648, 3
        %v728 = vsel %vm725, %v726, %v727
        %v729 = vrot.slane %v650, 3
        %v730 = vrot.slane %v651, 3
        %v731 = vsel %vm725, %v729, %v730
        %v732 = vrot.slane %v653, 3
        %v733 = vrot.slane %v654, 3
        %v734 = vsel %vm725, %v732, %v733
        %v735 = vrot.slane %v656, 3
        %v736 = vrot.slane %v657, 3
        %v737 = vsel %vm725, %v735, %v736
        %v738 = vrot.slane %v659, 3
        %v739 = vrot.slane %v660, 3
        %v740 = vsel %vm725, %v738, %v739
        %v741 = vrot.slane %v662, 3
        %v742 = vrot.slane %v663, 3
        %v743 = vsel %vm725, %v741, %v742
        %v744 = vrot.slane %v665, 3
        %v745 = vrot.slane %v666, 3
        %v746 = vsel %vm725, %v744, %v745
        %v747 = vrot.slane %v668, 3
        %v748 = vrot.slane %v669, 3
        %v749 = vsel %vm725, %v747, %v748
        %v750 = vrot.slane %v671, 3
        %v751 = vrot.slane %v672, 3
        %v752 = vsel %vm725, %v750, %v751
        %v753 = vrot.slane %v674, 3
        %v754 = vrot.slane %v675, 3
        %v755 = vsel %vm725, %v753, %v754
        %v756 = vrot.slane %v677, 3
        %v757 = vrot.slane %v678, 3
        %v758 = vsel %vm725, %v756, %v757
        %v759 = vrot.slane %v680, 3
        %v760 = vrot.slane %v681, 3
        %v761 = vsel %vm725, %v759, %v760
        %762 = vrot.lane.b32.xlu0 %v728, 8
        %v763 = vpop.permute.xlu0 %762
        %764 = vrot.lane.b32.xlu0 %v727, 8
        %v765 = vpop.permute.xlu0 %764
        %766 = vrot.lane.b32.xlu0 %v731, 8
        %v767 = vpop.permute.xlu0 %766
        %768 = vrot.lane.b32.xlu0 %v730, 8
        %v769 = vpop.permute.xlu0 %768
        %770 = vrot.lane.b32.xlu0 %v734, 8
        %v771 = vpop.permute.xlu0 %770
        %772 = vrot.lane.b32.xlu0 %v733, 8
        %v773 = vpop.permute.xlu0 %772
        %774 = vrot.lane.b32.xlu0 %v737, 8
        %v775 = vpop.permute.xlu0 %774
        %776 = vrot.lane.b32.xlu0 %v736, 8
        %v777 = vpop.permute.xlu0 %776
        %778 = vrot.lane.b32.xlu0 %v740, 8
        %v779 = vpop.permute.xlu0 %778
        %780 = vrot.lane.b32.xlu0 %v739, 8
        %v781 = vpop.permute.xlu0 %780
        %782 = vrot.lane.b32.xlu0 %v743, 8
        %v783 = vpop.permute.xlu0 %782
        %784 = vrot.lane.b32.xlu0 %v742, 8
        %v785 = vpop.permute.xlu0 %784
        %786 = vrot.lane.b32.xlu0 %v746, 8
        %v787 = vpop.permute.xlu0 %786
        %788 = vrot.lane.b32.xlu0 %v745, 8
        %v789 = vpop.permute.xlu0 %788
        %790 = vrot.lane.b32.xlu0 %v749, 8
        %v791 = vpop.permute.xlu0 %790
        %792 = vrot.lane.b32.xlu0 %v748, 8
        %v793 = vpop.permute.xlu0 %792
        %794 = vrot.lane.b32.xlu0 %v752, 8
        %v795 = vpop.permute.xlu0 %794
        %796 = vrot.lane.b32.xlu0 %v751, 8
        %v797 = vpop.permute.xlu0 %796
        %798 = vrot.lane.b32.xlu0 %v755, 8
        %v799 = vpop.permute.xlu0 %798
        %800 = vrot.lane.b32.xlu0 %v754, 8
        %v801 = vpop.permute.xlu0 %800
        %802 = vrot.lane.b32.xlu0 %v758, 8
        %v803 = vpop.permute.xlu0 %802
        %804 = vrot.lane.b32.xlu0 %v757, 8
        %v805 = vpop.permute.xlu0 %804
        %806 = vrot.lane.b32.xlu0 %v761, 8
        %v807 = vpop.permute.xlu0 %806
        %808 = vrot.lane.b32.xlu0 %v760, 8
        %v809 = vpop.permute.xlu0 %808
        %vm846 = vcmask 1041408
        %v847 = vrot.slane %v647, 6
        %v848 = vrot.slane %v648, 6
        %v849 = vsel %vm846, %v847, %v848
        %v850 = vrot.slane %v649, 6
        %v851 = vsel %vm846, %v848, %v850
        %v852 = vrot.slane %v650, 6
        %v853 = vrot.slane %v651, 6
        %v854 = vsel %vm846, %v852, %v853
        %v855 = vrot.slane %v652, 6
        %v856 = vsel %vm846, %v853, %v855
        %v857 = vrot.slane %v653, 6
        %v858 = vrot.slane %v654, 6
        %v859 = vsel %vm846, %v857, %v858
        %v860 = vrot.slane %v655, 6
        %v861 = vsel %vm846, %v858, %v860
        %v862 = vrot.slane %v656, 6
        %v863 = vrot.slane %v657, 6
        %v864 = vsel %vm846, %v862, %v863
        %v865 = vrot.slane %v658, 6
        %v866 = vsel %vm846, %v863, %v865
        %v867 = vrot.slane %v659, 6
        %v868 = vrot.slane %v660, 6
        %v869 = vsel %vm846, %v867, %v868
        %v870 = vrot.slane %v661, 6
        %v871 = vsel %vm846, %v868, %v870
        %v872 = vrot.slane %v662, 6
        %v873 = vrot.slane %v663, 6
        %v874 = vsel %vm846, %v872, %v873
        %v875 = vrot.slane %v664, 6
        %v876 = vsel %vm846, %v873, %v875
        %v877 = vrot.slane %v665, 6
        %v878 = vrot.slane %v666, 6
        %v879 = vsel %vm846, %v877, %v878
        %v880 = vrot.slane %v667, 6
        %v881 = vsel %vm846, %v878, %v880
        %v882 = vrot.slane %v668, 6
        %v883 = vrot.slane %v669, 6
        %v884 = vsel %vm846, %v882, %v883
        %v885 = vrot.slane %v670, 6
        %v886 = vsel %vm846, %v883, %v885
        %v887 = vrot.slane %v671, 6
        %v888 = vrot.slane %v672, 6
        %v889 = vsel %vm846, %v887, %v888
        %v890 = vrot.slane %v673, 6
        %v891 = vsel %vm846, %v888, %v890
        %v892 = vrot.slane %v674, 6
        %v893 = vrot.slane %v675, 6
        %v894 = vsel %vm846, %v892, %v893
        %v895 = vrot.slane %v676, 6
        %v896 = vsel %vm846, %v893, %v895
        %v897 = vrot.slane %v677, 6
        %v898 = vrot.slane %v678, 6
        %v899 = vsel %vm846, %v897, %v898
        %v900 = vrot.slane %v679, 6
        %v901 = vsel %vm846, %v898, %v900
        %v902 = vrot.slane %v680, 6
        %v903 = vrot.slane %v681, 6
        %v904 = vsel %vm846, %v902, %v903
        %v905 = vrot.slane %v682, 6
        %v906 = vsel %vm846, %v903, %v905
        %907 = vrot.lane.b32.xlu0 %v849, 16
        %v908 = vpop.permute.xlu0 %907
        %909 = vrot.lane.b32.xlu0 %v851, 16
        %v910 = vpop.permute.xlu0 %909
        %911 = vrot.lane.b32.xlu0 %v854, 16
        %v912 = vpop.permute.xlu0 %911
        %913 = vrot.lane.b32.xlu0 %v856, 16
        %v914 = vpop.permute.xlu0 %913
        %915 = vrot.lane.b32.xlu0 %v859, 16
        %v916 = vpop.permute.xlu0 %915
        %917 = vrot.lane.b32.xlu0 %v861, 16
        %v918 = vpop.permute.xlu0 %917
        %919 = vrot.lane.b32.xlu0 %v864, 16
        %v920 = vpop.permute.xlu0 %919
        %921 = vrot.lane.b32.xlu0 %v866, 16
        %v922 = vpop.permute.xlu0 %921
        %923 = vrot.lane.b32.xlu0 %v869, 16
        %v924 = vpop.permute.xlu0 %923
        %925 = vrot.lane.b32.xlu0 %v871, 16
        %v926 = vpop.permute.xlu0 %925
        %927 = vrot.lane.b32.xlu0 %v874, 16
        %v928 = vpop.permute.xlu0 %927
        %929 = vrot.lane.b32.xlu0 %v876, 16
        %v930 = vpop.permute.xlu0 %929
        %931 = vrot.lane.b32.xlu0 %v879, 16
        %v932 = vpop.permute.xlu0 %931
        %933 = vrot.lane.b32.xlu0 %v881, 16
        %v934 = vpop.permute.xlu0 %933
        %935 = vrot.lane.b32.xlu0 %v884, 16
        %v936 = vpop.permute.xlu0 %935
        %937 = vrot.lane.b32.xlu0 %v886, 16
        %v938 = vpop.permute.xlu0 %937
        %939 = vrot.lane.b32.xlu0 %v889, 16
        %v940 = vpop.permute.xlu0 %939
        %941 = vrot.lane.b32.xlu0 %v891, 16
        %v942 = vpop.permute.xlu0 %941
        %943 = vrot.lane.b32.xlu0 %v894, 16
        %v944 = vpop.permute.xlu0 %943
        %945 = vrot.lane.b32.xlu0 %v896, 16
        %v946 = vpop.permute.xlu0 %945
        %947 = vrot.lane.b32.xlu0 %v899, 16
        %v948 = vpop.permute.xlu0 %947
        %949 = vrot.lane.b32.xlu0 %v901, 16
        %v950 = vpop.permute.xlu0 %949
        %951 = vrot.lane.b32.xlu0 %v904, 16
        %v952 = vpop.permute.xlu0 %951
        %953 = vrot.lane.b32.xlu0 %v906, 16
        %v954 = vpop.permute.xlu0 %953
        %985 = vrot.lane.b32.xlu0 %v656, 24
        %v986 = vpop.permute.xlu0 %985
        %987 = vrot.lane.b32.xlu0 %v657, 24
        %v988 = vpop.permute.xlu0 %987
        %989 = vrot.lane.b32.xlu0 %v659, 24
        %v990 = vpop.permute.xlu0 %989
        %991 = vrot.lane.b32.xlu0 %v660, 24
        %v992 = vpop.permute.xlu0 %991
        %993 = vrot.lane.b32.xlu0 %v662, 24
        %v994 = vpop.permute.xlu0 %993
        %995 = vrot.lane.b32.xlu0 %v663, 24
        %v996 = vpop.permute.xlu0 %995
        %997 = vrot.lane.b32.xlu0 %v665, 24
        %v998 = vpop.permute.xlu0 %997
        %999 = vrot.lane.b32.xlu0 %v666, 24
        %v1000 = vpop.permute.xlu0 %999
        %1001 = vrot.lane.b32.xlu0 %v668, 24
        %v1002 = vpop.permute.xlu0 %1001
        %1003 = vrot.lane.b32.xlu0 %v669, 24
        %v1004 = vpop.permute.xlu0 %1003
        %1005 = vrot.lane.b32.xlu0 %v671, 24
        %v1006 = vpop.permute.xlu0 %1005
        %1007 = vrot.lane.b32.xlu0 %v672, 24
        %v1008 = vpop.permute.xlu0 %1007
        %1009 = vrot.lane.b32.xlu0 %v674, 24
        %v1010 = vpop.permute.xlu0 %1009
        %1011 = vrot.lane.b32.xlu0 %v675, 24
        %v1012 = vpop.permute.xlu0 %1011
        %1013 = vrot.lane.b32.xlu0 %v677, 24
        %v1014 = vpop.permute.xlu0 %1013
        %1015 = vrot.lane.b32.xlu0 %v678, 24
        %v1016 = vpop.permute.xlu0 %1015
        %1017 = vrot.lane.b32.xlu0 %v680, 24
        %v1018 = vpop.permute.xlu0 %1017
        %1019 = vrot.lane.b32.xlu0 %v681, 24
        %v1020 = vpop.permute.xlu0 %1019
        %1021 = vrot.lane.b32.xlu0 %v683, 24
        %v1022 = vpop.permute.xlu0 %1021
        %1023 = vrot.lane.b32.xlu0 %v684, 24
        %v1024 = vpop.permute.xlu0 %1023
        %1025 = vrot.lane.b32.xlu0 %v686, 24
        %v1026 = vpop.permute.xlu0 %1025
        %1027 = vrot.lane.b32.xlu0 %v687, 24
        %v1028 = vpop.permute.xlu0 %1027
        %1029 = vrot.lane.b32.xlu0 %v689, 24
        %v1030 = vpop.permute.xlu0 %1029
        %1031 = vrot.lane.b32.xlu0 %v690, 24
        %v1032 = vpop.permute.xlu0 %1031
        %v1057 = vrot.slane %v683, 3
        %v1058 = vrot.slane %v684, 3
        %v1059 = vsel %vm725, %v1057, %v1058
        %v1060 = vrot.slane %v686, 3
        %v1061 = vrot.slane %v687, 3
        %v1062 = vsel %vm725, %v1060, %v1061
        %v1063 = vrot.slane %v689, 3
        %v1064 = vrot.slane %v690, 3
        %v1065 = vsel %vm725, %v1063, %v1064
        %1066 = vrot.lane.b32.xlu0 %v737, 32
        %v1067 = vpop.permute.xlu0 %1066
        %1068 = vrot.lane.b32.xlu0 %v736, 32
        %v1069 = vpop.permute.xlu0 %1068
        %1070 = vrot.lane.b32.xlu0 %v740, 32
        %v1071 = vpop.permute.xlu0 %1070
        %1072 = vrot.lane.b32.xlu0 %v739, 32
        %v1073 = vpop.permute.xlu0 %1072
        %1074 = vrot.lane.b32.xlu0 %v743, 32
        %v1075 = vpop.permute.xlu0 %1074
        %1076 = vrot.lane.b32.xlu0 %v742, 32
        %v1077 = vpop.permute.xlu0 %1076
        %1078 = vrot.lane.b32.xlu0 %v746, 32
        %v1079 = vpop.permute.xlu0 %1078
        %1080 = vrot.lane.b32.xlu0 %v745, 32
        %v1081 = vpop.permute.xlu0 %1080
        %1082 = vrot.lane.b32.xlu0 %v749, 32
        %v1083 = vpop.permute.xlu0 %1082
        %1084 = vrot.lane.b32.xlu0 %v748, 32
        %v1085 = vpop.permute.xlu0 %1084
        %1086 = vrot.lane.b32.xlu0 %v752, 32
        %v1087 = vpop.permute.xlu0 %1086
        %1088 = vrot.lane.b32.xlu0 %v751, 32
        %v1089 = vpop.permute.xlu0 %1088
        %1090 = vrot.lane.b32.xlu0 %v755, 32
        %v1091 = vpop.permute.xlu0 %1090
        %1092 = vrot.lane.b32.xlu0 %v754, 32
        %v1093 = vpop.permute.xlu0 %1092
        %1094 = vrot.lane.b32.xlu0 %v758, 32
        %v1095 = vpop.permute.xlu0 %1094
        %1096 = vrot.lane.b32.xlu0 %v757, 32
        %v1097 = vpop.permute.xlu0 %1096
        %1098 = vrot.lane.b32.xlu0 %v761, 32
        %v1099 = vpop.permute.xlu0 %1098
        %1100 = vrot.lane.b32.xlu0 %v760, 32
        %v1101 = vpop.permute.xlu0 %1100
        %1102 = vrot.lane.b32.xlu0 %v1059, 32
        %v1103 = vpop.permute.xlu0 %1102
        %1104 = vrot.lane.b32.xlu0 %v1058, 32
        %v1105 = vpop.permute.xlu0 %1104
        %1106 = vrot.lane.b32.xlu0 %v1062, 32
        %v1107 = vpop.permute.xlu0 %1106
        %1108 = vrot.lane.b32.xlu0 %v1061, 32
        %v1109 = vpop.permute.xlu0 %1108
        %1110 = vrot.lane.b32.xlu0 %v1065, 32
        %v1111 = vpop.permute.xlu0 %1110
        %1112 = vrot.lane.b32.xlu0 %v1064, 32
        %v1113 = vpop.permute.xlu0 %1112
        %v1141 = vrot.slane %v683, 6
        %v1142 = vrot.slane %v684, 6
        %v1143 = vsel %vm846, %v1141, %v1142
        %v1144 = vrot.slane %v685, 6
        %v1145 = vsel %vm846, %v1142, %v1144
        %v1146 = vrot.slane %v686, 6
        %v1147 = vrot.slane %v687, 6
        %v1148 = vsel %vm846, %v1146, %v1147
        %v1149 = vrot.slane %v688, 6
        %v1150 = vsel %vm846, %v1147, %v1149
        %v1151 = vrot.slane %v689, 6
        %v1152 = vrot.slane %v690, 6
        %v1153 = vsel %vm846, %v1151, %v1152
        %v1154 = vrot.slane %v691, 6
        %v1155 = vsel %vm846, %v1152, %v1154
        %1156 = vrot.lane.b32.xlu0 %v864, 40
        %v1157 = vpop.permute.xlu0 %1156
        %1158 = vrot.lane.b32.xlu0 %v866, 40
        %v1159 = vpop.permute.xlu0 %1158
        %1160 = vrot.lane.b32.xlu0 %v869, 40
        %v1161 = vpop.permute.xlu0 %1160
        %1162 = vrot.lane.b32.xlu0 %v871, 40
        %v1163 = vpop.permute.xlu0 %1162
        %1164 = vrot.lane.b32.xlu0 %v874, 40
        %v1165 = vpop.permute.xlu0 %1164
        %1166 = vrot.lane.b32.xlu0 %v876, 40
        %v1167 = vpop.permute.xlu0 %1166
        %1168 = vrot.lane.b32.xlu0 %v879, 40
        %v1169 = vpop.permute.xlu0 %1168
        %1170 = vrot.lane.b32.xlu0 %v881, 40
        %v1171 = vpop.permute.xlu0 %1170
        %1172 = vrot.lane.b32.xlu0 %v884, 40
        %v1173 = vpop.permute.xlu0 %1172
        %1174 = vrot.lane.b32.xlu0 %v886, 40
        %v1175 = vpop.permute.xlu0 %1174
        %1176 = vrot.lane.b32.xlu0 %v889, 40
        %v1177 = vpop.permute.xlu0 %1176
        %1178 = vrot.lane.b32.xlu0 %v891, 40
        %v1179 = vpop.permute.xlu0 %1178
        %1180 = vrot.lane.b32.xlu0 %v894, 40
        %v1181 = vpop.permute.xlu0 %1180
        %1182 = vrot.lane.b32.xlu0 %v896, 40
        %v1183 = vpop.permute.xlu0 %1182
        %1184 = vrot.lane.b32.xlu0 %v899, 40
        %v1185 = vpop.permute.xlu0 %1184
        %1186 = vrot.lane.b32.xlu0 %v901, 40
        %v1187 = vpop.permute.xlu0 %1186
        %1188 = vrot.lane.b32.xlu0 %v904, 40
        %v1189 = vpop.permute.xlu0 %1188
        %1190 = vrot.lane.b32.xlu0 %v906, 40
        %v1191 = vpop.permute.xlu0 %1190
        %1192 = vrot.lane.b32.xlu0 %v1143, 40
        %v1193 = vpop.permute.xlu0 %1192
        %1194 = vrot.lane.b32.xlu0 %v1145, 40
        %v1195 = vpop.permute.xlu0 %1194
        %1196 = vrot.lane.b32.xlu0 %v1148, 40
        %v1197 = vpop.permute.xlu0 %1196
        %1198 = vrot.lane.b32.xlu0 %v1150, 40
        %v1199 = vpop.permute.xlu0 %1198
        %1200 = vrot.lane.b32.xlu0 %v1153, 40
        %v1201 = vpop.permute.xlu0 %1200
        %1202 = vrot.lane.b32.xlu0 %v1155, 40
        %v1203 = vpop.permute.xlu0 %1202
        %1234 = vrot.lane.b32.xlu0 %v665, 48
        %v1235 = vpop.permute.xlu0 %1234
        %1236 = vrot.lane.b32.xlu0 %v666, 48
        %v1237 = vpop.permute.xlu0 %1236
        %1238 = vrot.lane.b32.xlu0 %v668, 48
        %v1239 = vpop.permute.xlu0 %1238
        %1240 = vrot.lane.b32.xlu0 %v669, 48
        %v1241 = vpop.permute.xlu0 %1240
        %1242 = vrot.lane.b32.xlu0 %v671, 48
        %v1243 = vpop.permute.xlu0 %1242
        %1244 = vrot.lane.b32.xlu0 %v672, 48
        %v1245 = vpop.permute.xlu0 %1244
        %1246 = vrot.lane.b32.xlu0 %v674, 48
        %v1247 = vpop.permute.xlu0 %1246
        %1248 = vrot.lane.b32.xlu0 %v675, 48
        %v1249 = vpop.permute.xlu0 %1248
        %1250 = vrot.lane.b32.xlu0 %v677, 48
        %v1251 = vpop.permute.xlu0 %1250
        %1252 = vrot.lane.b32.xlu0 %v678, 48
        %v1253 = vpop.permute.xlu0 %1252
        %1254 = vrot.lane.b32.xlu0 %v680, 48
        %v1255 = vpop.permute.xlu0 %1254
        %1256 = vrot.lane.b32.xlu0 %v681, 48
        %v1257 = vpop.permute.xlu0 %1256
        %1258 = vrot.lane.b32.xlu0 %v683, 48
        %v1259 = vpop.permute.xlu0 %1258
        %1260 = vrot.lane.b32.xlu0 %v684, 48
        %v1261 = vpop.permute.xlu0 %1260
        %1262 = vrot.lane.b32.xlu0 %v686, 48
        %v1263 = vpop.permute.xlu0 %1262
        %1264 = vrot.lane.b32.xlu0 %v687, 48
        %v1265 = vpop.permute.xlu0 %1264
        %1266 = vrot.lane.b32.xlu0 %v689, 48
        %v1267 = vpop.permute.xlu0 %1266
        %1268 = vrot.lane.b32.xlu0 %v690, 48
        %v1269 = vpop.permute.xlu0 %1268
        %1270 = vrot.lane.b32.xlu0 %v692, 48
        %v1271 = vpop.permute.xlu0 %1270
        %1272 = vrot.lane.b32.xlu0 %v693, 48
        %v1273 = vpop.permute.xlu0 %1272
        %1274 = vrot.lane.b32.xlu0 %v695, 48
        %v1275 = vpop.permute.xlu0 %1274
        %1276 = vrot.lane.b32.xlu0 %v696, 48
        %v1277 = vpop.permute.xlu0 %1276
        %1278 = vrot.lane.b32.xlu0 %v698, 48
        %v1279 = vpop.permute.xlu0 %1278
        %1280 = vrot.lane.b32.xlu0 %v699, 48
        %v1281 = vpop.permute.xlu0 %1280
        %v1306 = vrot.slane %v692, 3
        %v1307 = vrot.slane %v693, 3
        %v1308 = vsel %vm725, %v1306, %v1307
        %v1309 = vrot.slane %v695, 3
        %v1310 = vrot.slane %v696, 3
        %v1311 = vsel %vm725, %v1309, %v1310
        %v1312 = vrot.slane %v698, 3
        %v1313 = vrot.slane %v699, 3
        %v1314 = vsel %vm725, %v1312, %v1313
        %1315 = vrot.lane.b32.xlu0 %v746, 56
        %v1316 = vpop.permute.xlu0 %1315
        %1317 = vrot.lane.b32.xlu0 %v745, 56
        %v1318 = vpop.permute.xlu0 %1317
        %1319 = vrot.lane.b32.xlu0 %v749, 56
        %v1320 = vpop.permute.xlu0 %1319
        %1321 = vrot.lane.b32.xlu0 %v748, 56
        %v1322 = vpop.permute.xlu0 %1321
        %1323 = vrot.lane.b32.xlu0 %v752, 56
        %v1324 = vpop.permute.xlu0 %1323
        %1325 = vrot.lane.b32.xlu0 %v751, 56
        %v1326 = vpop.permute.xlu0 %1325
        %1327 = vrot.lane.b32.xlu0 %v755, 56
        %v1328 = vpop.permute.xlu0 %1327
        %1329 = vrot.lane.b32.xlu0 %v754, 56
        %v1330 = vpop.permute.xlu0 %1329
        %1331 = vrot.lane.b32.xlu0 %v758, 56
        %v1332 = vpop.permute.xlu0 %1331
        %1333 = vrot.lane.b32.xlu0 %v757, 56
        %v1334 = vpop.permute.xlu0 %1333
        %1335 = vrot.lane.b32.xlu0 %v761, 56
        %v1336 = vpop.permute.xlu0 %1335
        %1337 = vrot.lane.b32.xlu0 %v760, 56
        %v1338 = vpop.permute.xlu0 %1337
        %1339 = vrot.lane.b32.xlu0 %v1059, 56
        %v1340 = vpop.permute.xlu0 %1339
        %1341 = vrot.lane.b32.xlu0 %v1058, 56
        %v1342 = vpop.permute.xlu0 %1341
        %1343 = vrot.lane.b32.xlu0 %v1062, 56
        %v1344 = vpop.permute.xlu0 %1343
        %1345 = vrot.lane.b32.xlu0 %v1061, 56
        %v1346 = vpop.permute.xlu0 %1345
        %1347 = vrot.lane.b32.xlu0 %v1065, 56
        %v1348 = vpop.permute.xlu0 %1347
        %1349 = vrot.lane.b32.xlu0 %v1064, 56
        %v1350 = vpop.permute.xlu0 %1349
        %1351 = vrot.lane.b32.xlu0 %v1308, 56
        %v1352 = vpop.permute.xlu0 %1351
        %1353 = vrot.lane.b32.xlu0 %v1307, 56
        %v1354 = vpop.permute.xlu0 %1353
        %1355 = vrot.lane.b32.xlu0 %v1311, 56
        %v1356 = vpop.permute.xlu0 %1355
        %1357 = vrot.lane.b32.xlu0 %v1310, 56
        %v1358 = vpop.permute.xlu0 %1357
        %1359 = vrot.lane.b32.xlu0 %v1314, 56
        %v1360 = vpop.permute.xlu0 %1359
        %1361 = vrot.lane.b32.xlu0 %v1313, 56
        %v1362 = vpop.permute.xlu0 %1361
        %v1390 = vrot.slane %v692, 6
        %v1391 = vrot.slane %v693, 6
        %v1392 = vsel %vm846, %v1390, %v1391
        %v1393 = vrot.slane %v694, 6
        %v1394 = vsel %vm846, %v1391, %v1393
        %v1395 = vrot.slane %v695, 6
        %v1396 = vrot.slane %v696, 6
        %v1397 = vsel %vm846, %v1395, %v1396
        %v1398 = vrot.slane %v697, 6
        %v1399 = vsel %vm846, %v1396, %v1398
        %v1400 = vrot.slane %v698, 6
        %v1401 = vrot.slane %v699, 6
        %v1402 = vsel %vm846, %v1400, %v1401
        %v1403 = vrot.slane %v700, 6
        %v1404 = vsel %vm846, %v1401, %v1403
        %1405 = vrot.lane.b32.xlu0 %v879, 64
        %v1406 = vpop.permute.xlu0 %1405
        %1407 = vrot.lane.b32.xlu0 %v881, 64
        %v1408 = vpop.permute.xlu0 %1407
        %1409 = vrot.lane.b32.xlu0 %v884, 64
        %v1410 = vpop.permute.xlu0 %1409
        %1411 = vrot.lane.b32.xlu0 %v886, 64
        %v1412 = vpop.permute.xlu0 %1411
        %1413 = vrot.lane.b32.xlu0 %v889, 64
        %v1414 = vpop.permute.xlu0 %1413
        %1415 = vrot.lane.b32.xlu0 %v891, 64
        %v1416 = vpop.permute.xlu0 %1415
        %1417 = vrot.lane.b32.xlu0 %v894, 64
        %v1418 = vpop.permute.xlu0 %1417
        %1419 = vrot.lane.b32.xlu0 %v896, 64
        %v1420 = vpop.permute.xlu0 %1419
        %1421 = vrot.lane.b32.xlu0 %v899, 64
        %v1422 = vpop.permute.xlu0 %1421
        %1423 = vrot.lane.b32.xlu0 %v901, 64
        %v1424 = vpop.permute.xlu0 %1423
        %1425 = vrot.lane.b32.xlu0 %v904, 64
        %v1426 = vpop.permute.xlu0 %1425
        %1427 = vrot.lane.b32.xlu0 %v906, 64
        %v1428 = vpop.permute.xlu0 %1427
        %1429 = vrot.lane.b32.xlu0 %v1143, 64
        %v1430 = vpop.permute.xlu0 %1429
        %1431 = vrot.lane.b32.xlu0 %v1145, 64
        %v1432 = vpop.permute.xlu0 %1431
        %1433 = vrot.lane.b32.xlu0 %v1148, 64
        %v1434 = vpop.permute.xlu0 %1433
        %1435 = vrot.lane.b32.xlu0 %v1150, 64
        %v1436 = vpop.permute.xlu0 %1435
        %1437 = vrot.lane.b32.xlu0 %v1153, 64
        %v1438 = vpop.permute.xlu0 %1437
        %1439 = vrot.lane.b32.xlu0 %v1155, 64
        %v1440 = vpop.permute.xlu0 %1439
        %1441 = vrot.lane.b32.xlu0 %v1392, 64
        %v1442 = vpop.permute.xlu0 %1441
        %1443 = vrot.lane.b32.xlu0 %v1394, 64
        %v1444 = vpop.permute.xlu0 %1443
        %1445 = vrot.lane.b32.xlu0 %v1397, 64
        %v1446 = vpop.permute.xlu0 %1445
        %1447 = vrot.lane.b32.xlu0 %v1399, 64
        %v1448 = vpop.permute.xlu0 %1447
        %1449 = vrot.lane.b32.xlu0 %v1402, 64
        %v1450 = vpop.permute.xlu0 %1449
        %1451 = vrot.lane.b32.xlu0 %v1404, 64
        %v1452 = vpop.permute.xlu0 %1451
        %vm1477 = vcmask 64512
        %v1478 = vsel %vm1477, %v647, %v763
        %v1479 = vsel %vm1477, %v648, %v765
        %v1480 = vsel %vm1477, %v650, %v767
        %v1481 = vsel %vm1477, %v651, %v769
        %v1482 = vsel %vm1477, %v653, %v771
        %v1483 = vsel %vm1477, %v654, %v773
        %v1484 = vsel %vm1477, %v656, %v775
        %v1485 = vsel %vm1477, %v657, %v777
        %v1486 = vsel %vm1477, %v659, %v779
        %v1487 = vsel %vm1477, %v660, %v781
        %v1488 = vsel %vm1477, %v662, %v783
        %v1489 = vsel %vm1477, %v663, %v785
        %v1490 = vsel %vm1477, %v665, %v787
        %v1491 = vsel %vm1477, %v666, %v789
        %v1492 = vsel %vm1477, %v668, %v791
        %v1493 = vsel %vm1477, %v669, %v793
        %v1494 = vsel %vm1477, %v671, %v795
        %v1495 = vsel %vm1477, %v672, %v797
        %v1496 = vsel %vm1477, %v674, %v799
        %v1497 = vsel %vm1477, %v675, %v801
        %v1498 = vsel %vm1477, %v677, %v803
        %v1499 = vsel %vm1477, %v678, %v805
        %v1500 = vsel %vm1477, %v680, %v807
        %v1501 = vsel %vm1477, %v681, %v809
        %vm1502 = vcmask 130048
        %v1503 = vsel %vm1502, %v1478, %v908
        %v1504 = vsel %vm1502, %v1479, %v910
        %v1505 = vsel %vm1502, %v1480, %v912
        %v1506 = vsel %vm1502, %v1481, %v914
        %v1507 = vsel %vm1502, %v1482, %v916
        %v1508 = vsel %vm1502, %v1483, %v918
        %v1509 = vsel %vm1502, %v1484, %v920
        %v1510 = vsel %vm1502, %v1485, %v922
        %v1511 = vsel %vm1502, %v1486, %v924
        %v1512 = vsel %vm1502, %v1487, %v926
        %v1513 = vsel %vm1502, %v1488, %v928
        %v1514 = vsel %vm1502, %v1489, %v930
        %v1515 = vsel %vm1502, %v1490, %v932
        %v1516 = vsel %vm1502, %v1491, %v934
        %v1517 = vsel %vm1502, %v1492, %v936
        %v1518 = vsel %vm1502, %v1493, %v938
        %v1519 = vsel %vm1502, %v1494, %v940
        %v1520 = vsel %vm1502, %v1495, %v942
        %v1521 = vsel %vm1502, %v1496, %v944
        %v1522 = vsel %vm1502, %v1497, %v946
        %v1523 = vsel %vm1502, %v1498, %v948
        %v1524 = vsel %vm1502, %v1499, %v950
        %v1525 = vsel %vm1502, %v1500, %v952
        %v1526 = vsel %vm1502, %v1501, %v954
        %vm1527 = vcmask 195584
        %v1528 = vsel %vm1527, %v1503, %v986
        %v1529 = vsel %vm1527, %v1504, %v988
        %v1530 = vsel %vm1527, %v1505, %v990
        %v1531 = vsel %vm1527, %v1506, %v992
        %v1532 = vsel %vm1527, %v1507, %v994
        %v1533 = vsel %vm1527, %v1508, %v996
        %v1534 = vsel %vm1527, %v1509, %v998
        %v1535 = vsel %vm1527, %v1510, %v1000
        %v1536 = vsel %vm1527, %v1511, %v1002
        %v1537 = vsel %vm1527, %v1512, %v1004
        %v1538 = vsel %vm1527, %v1513, %v1006
        %v1539 = vsel %vm1527, %v1514, %v1008
        %v1540 = vsel %vm1527, %v1515, %v1010
        %v1541 = vsel %vm1527, %v1516, %v1012
        %v1542 = vsel %vm1527, %v1517, %v1014
        %v1543 = vsel %vm1527, %v1518, %v1016
        %v1544 = vsel %vm1527, %v1519, %v1018
        %v1545 = vsel %vm1527, %v1520, %v1020
        %v1546 = vsel %vm1527, %v1521, %v1022
        %v1547 = vsel %vm1527, %v1522, %v1024
        %v1548 = vsel %vm1527, %v1523, %v1026
        %v1549 = vsel %vm1527, %v1524, %v1028
        %v1550 = vsel %vm1527, %v1525, %v1030
        %v1551 = vsel %vm1527, %v1526, %v1032
        %vm1552 = vcmask 261120
        %v1553 = vsel %vm1552, %v1528, %v1067
        %v1554 = vsel %vm1552, %v1529, %v1069
        %v1555 = vsel %vm1552, %v1530, %v1071
        %v1556 = vsel %vm1552, %v1531, %v1073
        %v1557 = vsel %vm1552, %v1532, %v1075
        %v1558 = vsel %vm1552, %v1533, %v1077
        %v1559 = vsel %vm1552, %v1534, %v1079
        %v1560 = vsel %vm1552, %v1535, %v1081
        %v1561 = vsel %vm1552, %v1536, %v1083
        %v1562 = vsel %vm1552, %v1537, %v1085
        %v1563 = vsel %vm1552, %v1538, %v1087
        %v1564 = vsel %vm1552, %v1539, %v1089
        %v1565 = vsel %vm1552, %v1540, %v1091
        %v1566 = vsel %vm1552, %v1541, %v1093
        %v1567 = vsel %vm1552, %v1542, %v1095
        %v1568 = vsel %vm1552, %v1543, %v1097
        %v1569 = vsel %vm1552, %v1544, %v1099
        %v1570 = vsel %vm1552, %v1545, %v1101
        %v1571 = vsel %vm1552, %v1546, %v1103
        %v1572 = vsel %vm1552, %v1547, %v1105
        %v1573 = vsel %vm1552, %v1548, %v1107
        %v1574 = vsel %vm1552, %v1549, %v1109
        %v1575 = vsel %vm1552, %v1550, %v1111
        %v1576 = vsel %vm1552, %v1551, %v1113
        %vm1577 = vcmask 326656
        %v1578 = vsel %vm1577, %v1553, %v1157
        %v1579 = vsel %vm1577, %v1554, %v1159
        %v1580 = vsel %vm1577, %v1555, %v1161
        %v1581 = vsel %vm1577, %v1556, %v1163
        %v1582 = vsel %vm1577, %v1557, %v1165
        %v1583 = vsel %vm1577, %v1558, %v1167
        %v1584 = vsel %vm1577, %v1559, %v1169
        %v1585 = vsel %vm1577, %v1560, %v1171
        %v1586 = vsel %vm1577, %v1561, %v1173
        %v1587 = vsel %vm1577, %v1562, %v1175
        %v1588 = vsel %vm1577, %v1563, %v1177
        %v1589 = vsel %vm1577, %v1564, %v1179
        %v1590 = vsel %vm1577, %v1565, %v1181
        %v1591 = vsel %vm1577, %v1566, %v1183
        %v1592 = vsel %vm1577, %v1567, %v1185
        %v1593 = vsel %vm1577, %v1568, %v1187
        %v1594 = vsel %vm1577, %v1569, %v1189
        %v1595 = vsel %vm1577, %v1570, %v1191
        %v1596 = vsel %vm1577, %v1571, %v1193
        %v1597 = vsel %vm1577, %v1572, %v1195
        %v1598 = vsel %vm1577, %v1573, %v1197
        %v1599 = vsel %vm1577, %v1574, %v1199
        %v1600 = vsel %vm1577, %v1575, %v1201
        %v1601 = vsel %vm1577, %v1576, %v1203
        %vm1602 = vcmask 392192
        %v1603 = vsel %vm1602, %v1578, %v1235
        %v1604 = vsel %vm1602, %v1579, %v1237
        %v1605 = vsel %vm1602, %v1580, %v1239
        %v1606 = vsel %vm1602, %v1581, %v1241
        %v1607 = vsel %vm1602, %v1582, %v1243
        %v1608 = vsel %vm1602, %v1583, %v1245
        %v1609 = vsel %vm1602, %v1584, %v1247
        %v1610 = vsel %vm1602, %v1585, %v1249
        %v1611 = vsel %vm1602, %v1586, %v1251
        %v1612 = vsel %vm1602, %v1587, %v1253
        %v1613 = vsel %vm1602, %v1588, %v1255
        %v1614 = vsel %vm1602, %v1589, %v1257
        %v1615 = vsel %vm1602, %v1590, %v1259
        %v1616 = vsel %vm1602, %v1591, %v1261
        %v1617 = vsel %vm1602, %v1592, %v1263
        %v1618 = vsel %vm1602, %v1593, %v1265
        %v1619 = vsel %vm1602, %v1594, %v1267
        %v1620 = vsel %vm1602, %v1595, %v1269
        %v1621 = vsel %vm1602, %v1596, %v1271
        %v1622 = vsel %vm1602, %v1597, %v1273
        %v1623 = vsel %vm1602, %v1598, %v1275
        %v1624 = vsel %vm1602, %v1599, %v1277
        %v1625 = vsel %vm1602, %v1600, %v1279
        %v1626 = vsel %vm1602, %v1601, %v1281
        %vm1627 = vcmask 457728
        %v1628 = vsel %vm1627, %v1603, %v1316
        %v1629 = vsel %vm1627, %v1604, %v1318
        %v1630 = vsel %vm1627, %v1605, %v1320
        %v1631 = vsel %vm1627, %v1606, %v1322
        %v1632 = vsel %vm1627, %v1607, %v1324
        %v1633 = vsel %vm1627, %v1608, %v1326
        %v1634 = vsel %vm1627, %v1609, %v1328
        %v1635 = vsel %vm1627, %v1610, %v1330
        %v1636 = vsel %vm1627, %v1611, %v1332
        %v1637 = vsel %vm1627, %v1612, %v1334
        %v1638 = vsel %vm1627, %v1613, %v1336
        %v1639 = vsel %vm1627, %v1614, %v1338
        %v1640 = vsel %vm1627, %v1615, %v1340
        %v1641 = vsel %vm1627, %v1616, %v1342
        %v1642 = vsel %vm1627, %v1617, %v1344
        %v1643 = vsel %vm1627, %v1618, %v1346
        %v1644 = vsel %vm1627, %v1619, %v1348
        %v1645 = vsel %vm1627, %v1620, %v1350
        %v1646 = vsel %vm1627, %v1621, %v1352
        %v1647 = vsel %vm1627, %v1622, %v1354
        %v1648 = vsel %vm1627, %v1623, %v1356
        %v1649 = vsel %vm1627, %v1624, %v1358
        %v1650 = vsel %vm1627, %v1625, %v1360
        %v1651 = vsel %vm1627, %v1626, %v1362
        %vm1652 = vcmask 523264
        %v1653 = vsel %vm1652, %v1628, %v1406
        %v1654 = vsel %vm1652, %v1629, %v1408
        %v1655 = vsel %vm1652, %v1630, %v1410
        %v1656 = vsel %vm1652, %v1631, %v1412
        %v1657 = vsel %vm1652, %v1632, %v1414
        %v1658 = vsel %vm1652, %v1633, %v1416
        %v1659 = vsel %vm1652, %v1634, %v1418
        %v1660 = vsel %vm1652, %v1635, %v1420
        %v1661 = vsel %vm1652, %v1636, %v1422
        %v1662 = vsel %vm1652, %v1637, %v1424
        %v1663 = vsel %vm1652, %v1638, %v1426
        %v1664 = vsel %vm1652, %v1639, %v1428
        %v1665 = vsel %vm1652, %v1640, %v1430
        %v1666 = vsel %vm1652, %v1641, %v1432
        %v1667 = vsel %vm1652, %v1642, %v1434
        %v1668 = vsel %vm1652, %v1643, %v1436
        %v1669 = vsel %vm1652, %v1644, %v1438
        %v1670 = vsel %vm1652, %v1645, %v1440
        %v1671 = vsel %vm1652, %v1646, %v1442
        %v1672 = vsel %vm1652, %v1647, %v1444
        %v1673 = vsel %vm1652, %v1648, %v1446
        %v1674 = vsel %vm1652, %v1649, %v1448
        %v1675 = vsel %vm1652, %v1650, %v1450
        %v1676 = vsel %vm1652, %v1651, %v1452
        %v1701 = vcombine.high %v1653, %v1653
        %v1702 = vcombine.high %v1655, %v1655
        %v1703 = vcombine.high %v1657, %v1657
        %v1704 = vcombine.high %v1659, %v1659
        %v1705 = vcombine.high %v1661, %v1661
        %v1706 = vcombine.high %v1663, %v1663
        %v1707 = vcombine.high %v1665, %v1665
        %v1708 = vcombine.high %v1667, %v1667
        %v1709 = vcombine.high %v1669, %v1669
        %v1710 = vcombine.high %v1671, %v1671
        %v1711 = vcombine.high %v1673, %v1673
        %v1712 = vcombine.high %v1675, %v1675
        %v1713 = vld [vmem:[%s2] sm:$0xff]
        %v1714 = vld [vmem:[%s2 + $0x8] sm:$0xff]
        %v1715 = vld [vmem:[%s2 + $0x10] sm:$0xff]
        %v1716 = vld [vmem:[%s2 + $0x18] sm:$0xff]
        %v1717 = vld [vmem:[%s2 + $0x20] sm:$0xff]
        %v1718 = vld [vmem:[%s2 + $0x28] sm:$0xff]
        %v1719 = vld [vmem:[%s2 + $0x30] sm:$0xff]
        %v1720 = vld [vmem:[%s2 + $0x38] sm:$0xff]
        %v1721 = vld [vmem:[%s2 + $0x40] sm:$0xff]
        %v1722 = vcombine.low %v1653, %v1701
        %v1723 = vcombine.low %v1654, %v1655
        %v1724 = vcombine.low %v1702, %v1656
        %v1725 = vcombine.low %v1657, %v1703
        %v1726 = vcombine.low %v1658, %v1659
        %v1727 = vcombine.low %v1704, %v1660
        %v1728 = vcombine.low %v1661, %v1705
        %v1729 = vcombine.low %v1662, %v1663
        %v1730 = vcombine.low %v1706, %v1664
        %v1731 = vcombine.low %v1665, %v1707
        %v1732 = vcombine.low %v1666, %v1667
        %v1733 = vcombine.low %v1708, %v1668
        %v1734 = vcombine.low %v1669, %v1709
        %v1735 = vcombine.low %v1670, %v1671
        %v1736 = vcombine.low %v1710, %v1672
        %v1737 = vcombine.low %v1673, %v1711
        %v1738 = vcombine.low %v1674, %v1675
        %v1739 = vcombine.low %v1712, %v1676
        %vm1740 = vcmask 588800
        %v1741 = vsel %vm1740, %v1722, 0
        %v1743 = vsel %vm1740, %v1723, 0
        %v1745 = vsel %vm1740, %v1724, 0
        %v1747 = vsel %vm1740, %v1725, 0
        %v1749 = vsel %vm1740, %v1726, 0
        %v1751 = vsel %vm1740, %v1727, 0
        %v1753 = vsel %vm1740, %v1728, 0
        %v1755 = vsel %vm1740, %v1729, 0
        %v1757 = vsel %vm1740, %v1730, 0
        %v1759 = vsel %vm1740, %v1731, 0
        %v1761 = vsel %vm1740, %v1732, 0
        %v1763 = vsel %vm1740, %v1733, 0
        %v1765 = vsel %vm1740, %v1734, 0
        %v1767 = vsel %vm1740, %v1735, 0
        %v1769 = vsel %vm1740, %v1736, 0
        %v1771 = vsel %vm1740, %v1737, 0
        %v1773 = vsel %vm1740, %v1738, 0
        %v1775 = vsel %vm1740, %v1739, 0
        %1777 = vmatprep.subr.mxu0 0.0
        %1778 = vmatpush1.msra.mxu0 %v1713
        %1779 = vmatprep.subr.mxu0 0.0
        %1780 = vmatpush1.msra.mxu0 %v1714
        %1781 = vmatprep.subr.mxu0 0.0
        %1782 = vmatpush1.msra.mxu0 %v1715
        %1783 = vmatprep.subr.mxu0 0.0
        %1784 = vmatpush1.msra.mxu0 %v1716
        %1785 = vmatprep.subr.mxu0 0.0
        %1786 = vmatpush1.msra.mxu0 %v1717
        %1787 = vmatprep.subr.mxu0 0.0
        %1788 = vmatpush1.msra.mxu0 %v1718
        %1789 = vmatprep.subr.mxu0 0.0
        %1790 = vmatpush1.msra.mxu0 %v1719
        %1791 = vmatprep.subr.mxu0 0.0
        %1792 = vmatpush1.msra.mxu0 %v1720
        %1793 = vmatprep.subr.mxu0 0.0
        %1794 = vmatpush1.msra.mxu0 %v1721
        %1795 = vmatprep.subr.mxu0 0.0
        %1796 = vmatpush1.msra.mxu0 0.0
        %1797 = vmatprep.subr.mxu0 0.0
        %1798 = vmatpush1.msra.mxu0 0.0
        %1799 = vmatprep.subr.mxu0 0.0
        %1800 = vmatpush1.msra.mxu0 0.0
        %1801 = vmatprep.subr.mxu0 0.0
        %1802 = vmatpush1.msra.mxu0 0.0
        %1803 = vmatprep.subr.mxu0 0.0
        %1804 = vmatpush1.msra.mxu0 0.0
        %1805 = vmatprep.subr.mxu0 0.0
        %1806 = vmatpush1.msra.mxu0 0.0
        %1807 = vmatprep.subr.mxu0 0.0
        %1808 = vmatpush1.msra.mxu0 0.0
        %1809 = vmatprep.subr.mxu0 0.0
        %1810 = vmatpush1.msra.mxu0 0.0
        %1811 = vmatprep.subr.mxu0 0.0
        %1812 = vmatpush1.msra.mxu0 0.0
        %1813 = vmatprep.subr.mxu0 0.0
        %1814 = vmatpush1.msra.mxu0 0.0
        %1815 = vmatprep.subr.mxu0 0.0
        %1816 = vmatpush1.msra.mxu0 0.0
        %1817 = vmatprep.subr.mxu0 0.0
        %1818 = vmatpush1.msra.mxu0 0.0
        %1819 = vmatprep.subr.mxu0 0.0
        %1820 = vmatpush1.msra.mxu0 0.0
        %1821 = vmatprep.subr.mxu0 0.0
        %1822 = vmatpush1.msra.mxu0 0.0
        %1823 = vmatprep.subr.mxu0 0.0
        %1824 = vmatpush1.msra.mxu0 0.0
        %1825 = vmatprep.subr.mxu0 0.0
        %1826 = vmatpush1.msra.mxu0 0.0
        %1827 = vmatprep.subr.mxu0 0.0
        %1828 = vmatpush1.msra.mxu0 0.0
        %1829 = vmatprep.subr.mxu0 0.0
        %1830 = vmatpush1.msra.mxu0 0.0
        %1831 = vmatprep.subr.mxu0 0.0
        %1832 = vmatpush1.msra.mxu0 0.0
        %1833 = vmatprep.subr.mxu0 0.0
        %1834 = vmatpush1.msra.mxu0 0.0
        %1835 = vmatprep.subr.mxu0 0.0
        %1836 = vmatpush1.msra.mxu0 0.0
        %1837 = vmatprep.subr.mxu0 0.0
        %1838 = vmatpush1.msra.mxu0 0.0
        %1839 = vmatprep.subr.mxu0 0.0
        %1840 = vmatpush1.msra.mxu0 0.0
        %1841 = vmatprep.mubr.f32.mxu0 0.0
        %1842 = vmatmul.mubr.f32.gmra.mrb[0].mxu0 %v1741
        %v1843 = vpop.f32.mrb[0].mxu0
        %v1844 = vadd.f32 0.0, %v1843
        %v1845 = vpop.f32.mrb[0].mxu0
        %1846 = vmatprep.mubr.f32.mxu0 0.0
        %1847 = vmatmul.mubr.f32.gmra.mrb[0].mxu0 %v1743
        %v1848 = vpop.f32.mrb[0].mxu0
        %v1849 = vadd.f32 0.0, %v1848
        %v1850 = vpop.f32.mrb[0].mxu0
        %1851 = vmatprep.mubr.f32.mxu0 0.0
        %1852 = vmatmul.mubr.f32.gmra.mrb[0].mxu0 %v1745
        %v1853 = vpop.f32.mrb[0].mxu0
        %v1854 = vadd.f32 0.0, %v1853
        %v1855 = vpop.f32.mrb[0].mxu0
        %1856 = vmatprep.mubr.f32.mxu0 0.0
        %1857 = vmatmul.mubr.f32.gmra.mrb[0].mxu0 %v1747
        %v1858 = vpop.f32.mrb[0].mxu0
        %v1859 = vadd.f32 0.0, %v1858
        %v1860 = vpop.f32.mrb[0].mxu0
        %1861 = vmatprep.mubr.f32.mxu0 0.0
        %1862 = vmatmul.mubr.f32.gmra.mrb[0].mxu0 %v1749
        %v1863 = vpop.f32.mrb[0].mxu0
        %v1864 = vadd.f32 0.0, %v1863
        %v1865 = vpop.f32.mrb[0].mxu0
        %1866 = vmatprep.mubr.f32.mxu0 0.0
        %1867 = vmatmul.mubr.f32.gmra.mrb[0].mxu0 %v1751
        %v1868 = vpop.f32.mrb[0].mxu0
        %v1869 = vadd.f32 0.0, %v1868
        %v1870 = vpop.f32.mrb[0].mxu0
        %1871 = vmatprep.mubr.f32.mxu0 0.0
        %1872 = vmatmul.mubr.f32.gmra.mrb[0].mxu0 %v1753
        %v1873 = vpop.f32.mrb[0].mxu0
        %v1874 = vadd.f32 0.0, %v1873
        %v1875 = vpop.f32.mrb[0].mxu0
        %1876 = vmatprep.mubr.f32.mxu0 0.0
        %1877 = vmatmul.mubr.f32.gmra.mrb[0].mxu0 %v1755
        %v1878 = vpop.f32.mrb[0].mxu0
        %v1879 = vadd.f32 0.0, %v1878
        %v1880 = vpop.f32.mrb[0].mxu0
        %1881 = vmatprep.mubr.f32.mxu0 0.0
        %1882 = vmatmul.mubr.f32.gmra.mrb[0].mxu0 %v1757
        %v1883 = vpop.f32.mrb[0].mxu0
        %v1884 = vadd.f32 0.0, %v1883
        %v1885 = vpop.f32.mrb[0].mxu0
        %1886 = vmatprep.mubr.f32.mxu0 0.0
        %1887 = vmatmul.mubr.f32.gmra.mrb[0].mxu0 %v1759
        %v1888 = vpop.f32.mrb[0].mxu0
        %v1889 = vadd.f32 0.0, %v1888
        %v1890 = vpop.f32.mrb[0].mxu0
        %1891 = vmatprep.mubr.f32.mxu0 0.0
        %1892 = vmatmul.mubr.f32.gmra.mrb[0].mxu0 %v1761
        %v1893 = vpop.f32.mrb[0].mxu0
        %v1894 = vadd.f32 0.0, %v1893
        %v1895 = vpop.f32.mrb[0].mxu0
        %1896 = vmatprep.mubr.f32.mxu0 0.0
        %1897 = vmatmul.mubr.f32.gmra.mrb[0].mxu0 %v1763
        %v1898 = vpop.f32.mrb[0].mxu0
        %v1899 = vadd.f32 0.0, %v1898
        %v1900 = vpop.f32.mrb[0].mxu0
        %1901 = vmatprep.mubr.f32.mxu0 0.0
        %1902 = vmatmul.mubr.f32.gmra.mrb[0].mxu0 %v1765
        %v1903 = vpop.f32.mrb[0].mxu0
        %v1904 = vadd.f32 0.0, %v1903
        %v1905 = vpop.f32.mrb[0].mxu0
        %1906 = vmatprep.mubr.f32.mxu0 0.0
        %1907 = vmatmul.mubr.f32.gmra.mrb[0].mxu0 %v1767
        %v1908 = vpop.f32.mrb[0].mxu0
        %v1909 = vadd.f32 0.0, %v1908
        %v1910 = vpop.f32.mrb[0].mxu0
        %1911 = vmatprep.mubr.f32.mxu0 0.0
        %1912 = vmatmul.mubr.f32.gmra.mrb[0].mxu0 %v1769
        %v1913 = vpop.f32.mrb[0].mxu0
        %v1914 = vadd.f32 0.0, %v1913
        %v1915 = vpop.f32.mrb[0].mxu0
        %1916 = vmatprep.mubr.f32.mxu0 0.0
        %1917 = vmatmul.mubr.f32.gmra.mrb[0].mxu0 %v1771
        %v1918 = vpop.f32.mrb[0].mxu0
        %v1919 = vadd.f32 0.0, %v1918
        %v1920 = vpop.f32.mrb[0].mxu0
        %1921 = vmatprep.mubr.f32.mxu0 0.0
        %1922 = vmatmul.mubr.f32.gmra.mrb[0].mxu0 %v1773
        %v1923 = vpop.f32.mrb[0].mxu0
        %v1924 = vadd.f32 0.0, %v1923
        %v1925 = vpop.f32.mrb[0].mxu0
        %1926 = vmatprep.mubr.f32.mxu0 0.0
        %1927 = vmatmul.mubr.f32.gmra.mrb[0].mxu0 %v1775
        %v1928 = vpop.f32.mrb[0].mxu0
        %v1929 = vadd.f32 0.0, %v1928
        %v1930 = vpop.f32.mrb[0].mxu0
        %1931 = vdwg.mxu0
        %vm1932 = vcmp.ne.f32.partialorder %v1844, 0.0
        %vm1933 = vcmp.ne.f32.partialorder %v1849, 0.0
        %vm1934 = vcmp.ne.f32.partialorder %v1854, 0.0
        %vm1935 = vcmp.ne.f32.partialorder %v1859, 0.0
        %vm1936 = vcmp.ne.f32.partialorder %v1864, 0.0
        %vm1937 = vcmp.ne.f32.partialorder %v1869, 0.0
        %vm1938 = vcmp.ne.f32.partialorder %v1874, 0.0
        %vm1939 = vcmp.ne.f32.partialorder %v1879, 0.0
        %vm1940 = vcmp.ne.f32.partialorder %v1884, 0.0
        %vm1941 = vcmp.ne.f32.partialorder %v1889, 0.0
        %vm1942 = vcmp.ne.f32.partialorder %v1894, 0.0
        %vm1943 = vcmp.ne.f32.partialorder %v1899, 0.0
        %vm1944 = vcmp.ne.f32.partialorder %v1904, 0.0
        %vm1945 = vcmp.ne.f32.partialorder %v1909, 0.0
        %vm1946 = vcmp.ne.f32.partialorder %v1914, 0.0
        %vm1947 = vcmp.ne.f32.partialorder %v1919, 0.0
        %vm1948 = vcmp.ne.f32.partialorder %v1924, 0.0
        %vm1949 = vcmp.ne.f32.partialorder %v1929, 0.0
        %v1950 = vsel %vm1932, 1, 0
        %v1951 = vsel %vm1933, 1, 0
        %v1952 = vsel %vm1934, 1, 0
        %v1953 = vsel %vm1935, 1, 0
        %v1954 = vsel %vm1936, 1, 0
        %v1955 = vsel %vm1937, 1, 0
        %v1956 = vsel %vm1938, 1, 0
        %v1957 = vsel %vm1939, 1, 0
        %v1958 = vsel %vm1940, 1, 0
        %v1959 = vsel %vm1941, 1, 0
        %v1960 = vsel %vm1942, 1, 0
        %v1961 = vsel %vm1943, 1, 0
        %v1962 = vsel %vm1944, 1, 0
        %v1963 = vsel %vm1945, 1, 0
        %v1964 = vsel %vm1946, 1, 0
        %v1965 = vsel %vm1947, 1, 0
        %v1966 = vsel %vm1948, 1, 0
        %v1967 = vsel %vm1949, 1, 0
        %v1968 = vcvt.s32.f32 %v1950
        %v1969 = vcvt.s32.f32 %v1951
        %v1970 = vcvt.s32.f32 %v1952
        %v1971 = vcvt.s32.f32 %v1953
        %v1972 = vcvt.s32.f32 %v1954
        %v1973 = vcvt.s32.f32 %v1955
        %v1974 = vcvt.s32.f32 %v1956
        %v1975 = vcvt.s32.f32 %v1957
        %v1976 = vcvt.s32.f32 %v1958
        %v1977 = vcvt.s32.f32 %v1959
        %v1978 = vcvt.s32.f32 %v1960
        %v1979 = vcvt.s32.f32 %v1961
        %v1980 = vcvt.s32.f32 %v1962
        %v1981 = vcvt.s32.f32 %v1963
        %v1982 = vcvt.s32.f32 %v1964
        %v1983 = vcvt.s32.f32 %v1965
        %v1984 = vcvt.s32.f32 %v1966
        %v1985 = vcvt.s32.f32 %v1967
        %v1986 = vsub.f32 1.0, %v1968
        %v1987 = vsub.f32 1.0, %v1969
        %v1988 = vsub.f32 1.0, %v1970
        %v1989 = vsub.f32 1.0, %v1971
        %v1990 = vsub.f32 1.0, %v1972
        %v1991 = vsub.f32 1.0, %v1973
        %v1992 = vsub.f32 1.0, %v1974
        %v1993 = vsub.f32 1.0, %v1975
        %v1994 = vsub.f32 1.0, %v1976
        %v1995 = vsub.f32 1.0, %v1977
        %v1996 = vsub.f32 1.0, %v1978
        %v1997 = vsub.f32 1.0, %v1979
        %v1998 = vsub.f32 1.0, %v1980
        %v1999 = vsub.f32 1.0, %v1981
        %v2000 = vsub.f32 1.0, %v1982
        %v2001 = vsub.f32 1.0, %v1983
        %v2002 = vsub.f32 1.0, %v1984
        %v2003 = vsub.f32 1.0, %v1985
        %v2004 = vadd.f32 %v1844, %v1986
        %v2005 = vadd.f32 %v1849, %v1987
        %v2006 = vadd.f32 %v1854, %v1988
        %v2007 = vadd.f32 %v1859, %v1989
        %v2008 = vadd.f32 %v1864, %v1990
        %v2009 = vadd.f32 %v1869, %v1991
        %v2010 = vadd.f32 %v1874, %v1992
        %v2011 = vadd.f32 %v1879, %v1993
        %v2012 = vadd.f32 %v1884, %v1994
        %v2013 = vadd.f32 %v1889, %v1995
        %v2014 = vadd.f32 %v1894, %v1996
        %v2015 = vadd.f32 %v1899, %v1997
        %v2016 = vadd.f32 %v1904, %v1998
        %v2017 = vadd.f32 %v1909, %v1999
        %v2018 = vadd.f32 %v1914, %v2000
        %v2019 = vadd.f32 %v1919, %v2001
        %v2020 = vadd.f32 %v1924, %v2002
        %v2021 = vadd.f32 %v1929, %v2003
        %v2022 = vrcp.pop %v2004
        %v2023 = vrcp.pop %v2005
        %v2024 = vrcp.pop %v2006
        %v2025 = vrcp.pop %v2007
        %v2026 = vrcp.pop %v2008
        %v2027 = vrcp.pop %v2009
        %v2028 = vrcp.pop %v2010
        %v2029 = vrcp.pop %v2011
        %v2030 = vrcp.pop %v2012
        %v2031 = vrcp.pop %v2013
        %v2032 = vrcp.pop %v2014
        %v2033 = vrcp.pop %v2015
        %v2034 = vrcp.pop %v2016
        %v2035 = vrcp.pop %v2017
        %v2036 = vrcp.pop %v2018
        %v2037 = vrcp.pop %v2019
        %v2038 = vrcp.pop %v2020
        %v2039 = vrcp.pop %v2021
        %2041 = vset.pattern.permute.xlu0 8
        %2042 = vperm.xlu0 %2041, %v2022
        %v2043 = vpop.permute.xlu0 %2042
        %2046 = vset.pattern.permute.xlu0 8
        %2047 = vperm.xlu0 %2046, %v2023
        %v2048 = vpop.permute.xlu0 %2047
        %2051 = vset.pattern.permute.xlu0 8
        %2052 = vperm.xlu0 %2051, %v2024
        %v2053 = vpop.permute.xlu0 %2052
        %2056 = vset.pattern.permute.xlu0 8
        %2057 = vperm.xlu0 %2056, %v2025
        %v2058 = vpop.permute.xlu0 %2057
        %2061 = vset.pattern.permute.xlu0 8
        %2062 = vperm.xlu0 %2061, %v2026
        %v2063 = vpop.permute.xlu0 %2062
        %2066 = vset.pattern.permute.xlu0 8
        %2067 = vperm.xlu0 %2066, %v2027
        %v2068 = vpop.permute.xlu0 %2067
        %2071 = vset.pattern.permute.xlu0 8
        %2072 = vperm.xlu0 %2071, %v2028
        %v2073 = vpop.permute.xlu0 %2072
        %2076 = vset.pattern.permute.xlu0 8
        %2077 = vperm.xlu0 %2076, %v2029
        %v2078 = vpop.permute.xlu0 %2077
        %2081 = vset.pattern.permute.xlu0 8
        %2082 = vperm.xlu0 %2081, %v2030
        %v2083 = vpop.permute.xlu0 %2082
        %2086 = vset.pattern.permute.xlu0 8
        %2087 = vperm.xlu0 %2086, %v2031
        %v2088 = vpop.permute.xlu0 %2087
        %2091 = vset.pattern.permute.xlu0 8
        %2092 = vperm.xlu0 %2091, %v2032
        %v2093 = vpop.permute.xlu0 %2092
        %2096 = vset.pattern.permute.xlu0 8
        %2097 = vperm.xlu0 %2096, %v2033
        %v2098 = vpop.permute.xlu0 %2097
        %2101 = vset.pattern.permute.xlu0 8
        %2102 = vperm.xlu0 %2101, %v2034
        %v2103 = vpop.permute.xlu0 %2102
        %2106 = vset.pattern.permute.xlu0 8
        %2107 = vperm.xlu0 %2106, %v2035
        %v2108 = vpop.permute.xlu0 %2107
        %2111 = vset.pattern.permute.xlu0 8
        %2112 = vperm.xlu0 %2111, %v2036
        %v2113 = vpop.permute.xlu0 %2112
        %2116 = vset.pattern.permute.xlu0 8
        %2117 = vperm.xlu0 %2116, %v2037
        %v2118 = vpop.permute.xlu0 %2117
        %2121 = vset.pattern.permute.xlu0 8
        %2122 = vperm.xlu0 %2121, %v2038
        %v2123 = vpop.permute.xlu0 %2122
        %2126 = vset.pattern.permute.xlu0 8
        %2127 = vperm.xlu0 %2126, %v2039
        %v2128 = vpop.permute.xlu0 %2127
        %v2130 = vmul.f32 %v1844, %v2043
        %v2131 = vmul.f32 %v1849, %v2048
        %v2132 = vmul.f32 %v1854, %v2053
        %v2133 = vmul.f32 %v1859, %v2058
        %v2134 = vmul.f32 %v1864, %v2063
        %v2135 = vmul.f32 %v1869, %v2068
        %v2136 = vmul.f32 %v1874, %v2073
        %v2137 = vmul.f32 %v1879, %v2078
        %v2138 = vmul.f32 %v1884, %v2083
        %v2139 = vmul.f32 %v1889, %v2088
        %v2140 = vmul.f32 %v1894, %v2093
        %v2141 = vmul.f32 %v1899, %v2098
        %v2142 = vmul.f32 %v1904, %v2103
        %v2143 = vmul.f32 %v1909, %v2108
        %v2144 = vmul.f32 %v1914, %v2113
        %v2145 = vmul.f32 %v1919, %v2118
        %v2146 = vmul.f32 %v1924, %v2123
        %v2147 = vmul.f32 %v1929, %v2128
        %2149 = vset.pattern.permute.xlu0 8
        %2150 = vperm.xlu0 %2149, %v1968
        %v2151 = vpop.permute.xlu0 %2150
        %2154 = vset.pattern.permute.xlu0 8
        %2155 = vperm.xlu0 %2154, %v1969
        %v2156 = vpop.permute.xlu0 %2155
        %2159 = vset.pattern.permute.xlu0 8
        %2160 = vperm.xlu0 %2159, %v1970
        %v2161 = vpop.permute.xlu0 %2160
        %2164 = vset.pattern.permute.xlu0 8
        %2165 = vperm.xlu0 %2164, %v1971
        %v2166 = vpop.permute.xlu0 %2165
        %2169 = vset.pattern.permute.xlu0 8
        %2170 = vperm.xlu0 %2169, %v1972
        %v2171 = vpop.permute.xlu0 %2170
        %2174 = vset.pattern.permute.xlu0 8
        %2175 = vperm.xlu0 %2174, %v1973
        %v2176 = vpop.permute.xlu0 %2175
        %2179 = vset.pattern.permute.xlu0 8
        %2180 = vperm.xlu0 %2179, %v1974
        %v2181 = vpop.permute.xlu0 %2180
        %2184 = vset.pattern.permute.xlu0 8
        %2185 = vperm.xlu0 %2184, %v1975
        %v2186 = vpop.permute.xlu0 %2185
        %2189 = vset.pattern.permute.xlu0 8
        %2190 = vperm.xlu0 %2189, %v1976
        %v2191 = vpop.permute.xlu0 %2190
        %2194 = vset.pattern.permute.xlu0 8
        %2195 = vperm.xlu0 %2194, %v1977
        %v2196 = vpop.permute.xlu0 %2195
        %2199 = vset.pattern.permute.xlu0 8
        %2200 = vperm.xlu0 %2199, %v1978
        %v2201 = vpop.permute.xlu0 %2200
        %2204 = vset.pattern.permute.xlu0 8
        %2205 = vperm.xlu0 %2204, %v1979
        %v2206 = vpop.permute.xlu0 %2205
        %2209 = vset.pattern.permute.xlu0 8
        %2210 = vperm.xlu0 %2209, %v1980
        %v2211 = vpop.permute.xlu0 %2210
        %2214 = vset.pattern.permute.xlu0 8
        %2215 = vperm.xlu0 %2214, %v1981
        %v2216 = vpop.permute.xlu0 %2215
        %2219 = vset.pattern.permute.xlu0 8
        %2220 = vperm.xlu0 %2219, %v1982
        %v2221 = vpop.permute.xlu0 %2220
        %2224 = vset.pattern.permute.xlu0 8
        %2225 = vperm.xlu0 %2224, %v1983
        %v2226 = vpop.permute.xlu0 %2225
        %2229 = vset.pattern.permute.xlu0 8
        %2230 = vperm.xlu0 %2229, %v1984
        %v2231 = vpop.permute.xlu0 %2230
        %2234 = vset.pattern.permute.xlu0 8
        %2235 = vperm.xlu0 %2234, %v1985
        %v2236 = vpop.permute.xlu0 %2235
        %v2238 = vmul.f32 %v2130, %v2151
        %v2239 = vmul.f32 %v2131, %v2156
        %v2240 = vmul.f32 %v2132, %v2161
        %v2241 = vmul.f32 %v2133, %v2166
        %v2242 = vmul.f32 %v2134, %v2171
        %v2243 = vmul.f32 %v2135, %v2176
        %v2244 = vmul.f32 %v2136, %v2181
        %v2245 = vmul.f32 %v2137, %v2186
        %v2246 = vmul.f32 %v2138, %v2191
        %v2247 = vmul.f32 %v2139, %v2196
        %v2248 = vmul.f32 %v2140, %v2201
        %v2249 = vmul.f32 %v2141, %v2206
        %v2250 = vmul.f32 %v2142, %v2211
        %v2251 = vmul.f32 %v2143, %v2216
        %v2252 = vmul.f32 %v2144, %v2221
        %v2253 = vmul.f32 %v2145, %v2226
        %v2254 = vmul.f32 %v2146, %v2231
        %v2255 = vmul.f32 %v2147, %v2236
        %v2274 = vcombine.high %v2238, %v2238
        %v2275 = vcombine.high %v2239, %v2239
        %v2276 = vcombine.high %v2240, %v2240
        %v2277 = vcombine.high %v2241, %v2241
        %v2278 = vcombine.high %v2242, %v2242
        %v2279 = vcombine.high %v2243, %v2243
        %v2280 = vcombine.high %v2244, %v2244
        %v2281 = vcombine.high %v2245, %v2245
        %v2282 = vcombine.high %v2246, %v2246
        %v2283 = vcombine.high %v2247, %v2247
        %v2284 = vcombine.high %v2248, %v2248
        %v2285 = vcombine.high %v2249, %v2249
        %v2286 = vcombine.high %v2250, %v2250
        %v2287 = vcombine.high %v2251, %v2251
        %v2288 = vcombine.high %v2252, %v2252
        %v2289 = vcombine.high %v2253, %v2253
        %v2290 = vcombine.high %v2254, %v2254
        %v2291 = vcombine.high %v2255, %v2255
        %v2298 = vcombine.low %v2238, %v2274
        %v2299 = vcombine.low %v2275, %v2240
        %v2300 = vcombine.low %v2241, %v2277
        %v2301 = vcombine.low %v2278, %v2243
        %v2302 = vcombine.low %v2244, %v2280
        %v2303 = vcombine.low %v2281, %v2246
        %v2304 = vcombine.low %v2247, %v2283
        %v2305 = vcombine.low %v2284, %v2249
        %v2306 = vcombine.low %v2250, %v2286
        %v2307 = vcombine.low %v2287, %v2252
        %v2308 = vcombine.low %v2253, %v2289
        %v2309 = vcombine.low %v2290, %v2255
        %2322 = vst.msk [vmem:[%s262] sm:$0xff] %vm1477, %v2298
        %vm2323 = vcmask 60416
        %2324 = vst.msk [vmem:[%s262 + $0x8] sm:$0xf] %vm2323, %v2239
        %2325 = vst.msk [vmem:[%s262 + $0x10] sm:$0xff] %vm1477, %v2299
        %2326 = vst.msk [vmem:[%s262 + $0x18] sm:$0xf] %vm2323, %v2276
        %2327 = vst.msk [vmem:[%s262 + $0x20] sm:$0xff] %vm1477, %v2300
        %2328 = vst.msk [vmem:[%s262 + $0x28] sm:$0xf] %vm2323, %v2242
        %2329 = vst.msk [vmem:[%s262 + $0x30] sm:$0xff] %vm1477, %v2301
        %2330 = vst.msk [vmem:[%s262 + $0x38] sm:$0xf] %vm2323, %v2279
        %2331 = vst.msk [vmem:[%s262 + $0x40] sm:$0xff] %vm1477, %v2302
        %2332 = vst.msk [vmem:[%s262 + $0x48] sm:$0xf] %vm2323, %v2245
        %2333 = vst.msk [vmem:[%s262 + $0x50] sm:$0xff] %vm1477, %v2303
        %2334 = vst.msk [vmem:[%s262 + $0x58] sm:$0xf] %vm2323, %v2282
        %2335 = vst.msk [vmem:[%s262 + $0x60] sm:$0xff] %vm1477, %v2304
        %2336 = vst.msk [vmem:[%s262 + $0x68] sm:$0xf] %vm2323, %v2248
        %2337 = vst.msk [vmem:[%s262 + $0x70] sm:$0xff] %vm1477, %v2305
        %2338 = vst.msk [vmem:[%s262 + $0x78] sm:$0xf] %vm2323, %v2285
        %2339 = vst.msk [vmem:[%s262 + $0x80] sm:$0xff] %vm1477, %v2306
        %2340 = vst.msk [vmem:[%s262 + $0x88] sm:$0xf] %vm2323, %v2251
        %2341 = vst.msk [vmem:[%s262 + $0x90] sm:$0xff] %vm1477, %v2307
        %2342 = vst.msk [vmem:[%s262 + $0x98] sm:$0xf] %vm2323, %v2288
        %2343 = vst.msk [vmem:[%s262 + $0xa0] sm:$0xff] %vm1477, %v2308
        %2344 = vst.msk [vmem:[%s262 + $0xa8] sm:$0xf] %vm2323, %v2254
        %2345 = vst.msk [vmem:[%s262 + $0xb0] sm:$0xff] %vm1477, %v2309
        %2346 = vst.msk [vmem:[%s262 + $0xb8] sm:$0xf] %vm2323, %v2291
        %v2347 = vcombine.high %v1968, %v1968
        %v2348 = vcombine.high %v1969, %v1969
        %v2349 = vcombine.high %v1970, %v1970
        %v2350 = vcombine.high %v1971, %v1971
        %v2351 = vcombine.high %v1972, %v1972
        %v2352 = vcombine.high %v1973, %v1973
        %v2353 = vcombine.high %v1974, %v1974
        %v2354 = vcombine.high %v1975, %v1975
        %v2355 = vcombine.high %v1976, %v1976
        %v2356 = vcombine.high %v1977, %v1977
        %v2357 = vcombine.high %v1978, %v1978
        %v2358 = vcombine.high %v1979, %v1979
        %v2359 = vcombine.high %v1980, %v1980
        %v2360 = vcombine.high %v1981, %v1981
        %v2361 = vcombine.high %v1982, %v1982
        %v2362 = vcombine.high %v1983, %v1983
        %v2363 = vcombine.high %v1984, %v1984
        %v2364 = vcombine.high %v1985, %v1985
        %v2365 = vcombine.low %v1968, %v2347
        %v2366 = vcombine.low %v2348, %v1970
        %v2367 = vcombine.low %v1971, %v2350
        %v2368 = vcombine.low %v2351, %v1973
        %v2369 = vcombine.low %v1974, %v2353
        %v2370 = vcombine.low %v2354, %v1976
        %v2371 = vcombine.low %v1977, %v2356
        %v2372 = vcombine.low %v2357, %v1979
        %v2373 = vcombine.low %v1980, %v2359
        %v2374 = vcombine.low %v2360, %v1982
        %v2375 = vcombine.low %v1983, %v2362
        %v2376 = vcombine.low %v2363, %v1985
        %2377 = vrot.lane.b32.xlu0 %v2365, 120
        %v2378 = vpop.permute.xlu0 %2377
        %2379 = vrot.lane.b32.xlu0 %v1969, 120
        %v2380 = vpop.permute.xlu0 %2379
        %2381 = vrot.lane.b32.xlu0 %v2366, 120
        %v2382 = vpop.permute.xlu0 %2381
        %2383 = vrot.lane.b32.xlu0 %v2349, 120
        %v2384 = vpop.permute.xlu0 %2383
        %2385 = vrot.lane.b32.xlu0 %v2367, 120
        %v2386 = vpop.permute.xlu0 %2385
        %2387 = vrot.lane.b32.xlu0 %v1972, 120
        %v2388 = vpop.permute.xlu0 %2387
        %2389 = vrot.lane.b32.xlu0 %v2368, 120
        %v2390 = vpop.permute.xlu0 %2389
        %2391 = vrot.lane.b32.xlu0 %v2352, 120
        %v2392 = vpop.permute.xlu0 %2391
        %2393 = vrot.lane.b32.xlu0 %v2369, 120
        %v2394 = vpop.permute.xlu0 %2393
        %2395 = vrot.lane.b32.xlu0 %v1975, 120
        %v2396 = vpop.permute.xlu0 %2395
        %2397 = vrot.lane.b32.xlu0 %v2370, 120
        %v2398 = vpop.permute.xlu0 %2397
        %2399 = vrot.lane.b32.xlu0 %v2355, 120
        %v2400 = vpop.permute.xlu0 %2399
        %2401 = vrot.lane.b32.xlu0 %v2371, 120
        %v2402 = vpop.permute.xlu0 %2401
        %2403 = vrot.lane.b32.xlu0 %v1978, 120
        %v2404 = vpop.permute.xlu0 %2403
        %2405 = vrot.lane.b32.xlu0 %v2372, 120
        %v2406 = vpop.permute.xlu0 %2405
        %2407 = vrot.lane.b32.xlu0 %v2358, 120
        %v2408 = vpop.permute.xlu0 %2407
        %2409 = vrot.lane.b32.xlu0 %v2373, 120
        %v2410 = vpop.permute.xlu0 %2409
        %2411 = vrot.lane.b32.xlu0 %v1981, 120
        %v2412 = vpop.permute.xlu0 %2411
        %2413 = vrot.lane.b32.xlu0 %v2374, 120
        %v2414 = vpop.permute.xlu0 %2413
        %2415 = vrot.lane.b32.xlu0 %v2361, 120
        %v2416 = vpop.permute.xlu0 %2415
        %2417 = vrot.lane.b32.xlu0 %v2375, 120
        %v2418 = vpop.permute.xlu0 %2417
        %2419 = vrot.lane.b32.xlu0 %v1984, 120
        %v2420 = vpop.permute.xlu0 %2419
        %2421 = vrot.lane.b32.xlu0 %v2376, 120
        %v2422 = vpop.permute.xlu0 %2421
        %2423 = vrot.lane.b32.xlu0 %v2364, 120
        %v2424 = vpop.permute.xlu0 %2423
        %vm2449 = vcmask 7168
        %2450 = vst.msk [vmem:[%s267] sm:$0xff] %vm2449, %v2378
        %vm2451 = vcmask 3072
        %2452 = vst.msk [vmem:[%s267 + $0x8] sm:$0xf] %vm2451, %v2380
        %2453 = vst.msk [vmem:[%s267 + $0x10] sm:$0xff] %vm2449, %v2382
        %2454 = vst.msk [vmem:[%s267 + $0x18] sm:$0xf] %vm2451, %v2384
        %2455 = vst.msk [vmem:[%s267 + $0x20] sm:$0xff] %vm2449, %v2386
        %2456 = vst.msk [vmem:[%s267 + $0x28] sm:$0xf] %vm2451, %v2388
        %2457 = vst.msk [vmem:[%s267 + $0x30] sm:$0xff] %vm2449, %v2390
        %2458 = vst.msk [vmem:[%s267 + $0x38] sm:$0xf] %vm2451, %v2392
        %2459 = vst.msk [vmem:[%s267 + $0x40] sm:$0xff] %vm2449, %v2394
        %2460 = vst.msk [vmem:[%s267 + $0x48] sm:$0xf] %vm2451, %v2396
        %2461 = vst.msk [vmem:[%s267 + $0x50] sm:$0xff] %vm2449, %v2398
        %2462 = vst.msk [vmem:[%s267 + $0x58] sm:$0xf] %vm2451, %v2400
        %2463 = vst.msk [vmem:[%s267 + $0x60] sm:$0xff] %vm2449, %v2402
        %2464 = vst.msk [vmem:[%s267 + $0x68] sm:$0xf] %vm2451, %v2404
        %2465 = vst.msk [vmem:[%s267 + $0x70] sm:$0xff] %vm2449, %v2406
        %2466 = vst.msk [vmem:[%s267 + $0x78] sm:$0xf] %vm2451, %v2408
        %2467 = vst.msk [vmem:[%s267 + $0x80] sm:$0xff] %vm2449, %v2410
        %2468 = vst.msk [vmem:[%s267 + $0x88] sm:$0xf] %vm2451, %v2412
        %2469 = vst.msk [vmem:[%s267 + $0x90] sm:$0xff] %vm2449, %v2414
        %2470 = vst.msk [vmem:[%s267 + $0x98] sm:$0xf] %vm2451, %v2416
        %2471 = vst.msk [vmem:[%s267 + $0xa0] sm:$0xff] %vm2449, %v2418
        %2472 = vst.msk [vmem:[%s267 + $0xa8] sm:$0xf] %vm2451, %v2420
        %2473 = vst.msk [vmem:[%s267 + $0xb0] sm:$0xff] %vm2449, %v2422
        %2474 = vst.msk [vmem:[%s267 + $0xb8] sm:$0xf] %vm2451, %v2424
        %v2475 = vadd.f32 %v2238, %v2239
        %v2476 = vadd.f32 %v2475, %v2240
        %v2477 = vadd.f32 %v2476, %v2241
        %v2478 = vadd.f32 %v2477, %v2242
        %v2479 = vadd.f32 %v2478, %v2243
        %v2480 = vadd.f32 %v2479, %v2244
        %v2481 = vadd.f32 %v2480, %v2245
        %v2482 = vadd.f32 %v2481, %v2246
        %v2483 = vadd.f32 %v2482, %v2247
        %v2484 = vadd.f32 %v2483, %v2248
        %v2485 = vadd.f32 %v2484, %v2249
        %v2486 = vadd.f32 %v2485, %v2250
        %v2487 = vadd.f32 %v2486, %v2251
        %v2488 = vadd.f32 %v2487, %v2252
        %v2489 = vadd.f32 %v2488, %v2253
        %v2490 = vadd.f32 %v2489, %v2254
        %v2491 = vadd.f32 %v2490, %v2255
        %v2492 = vrot.slane %v2491, 4
        %v2493 = vadd.f32 %v2491, %v2492
        %v2494 = vrot.slane %v2493, 2
        %v2495 = vadd.f32 %v2493, %v2494
        %v2496 = vrot.slane %v2495, 1
        %v2497 = vadd.f32 %v2495, %v2496
        %v2498 = vmul.f32 %v2238, %v2238
        %v2499 = vmul.f32 %v2239, %v2239
        %v2500 = vmul.f32 %v2240, %v2240
        %v2501 = vmul.f32 %v2241, %v2241
        %v2502 = vmul.f32 %v2242, %v2242
        %v2503 = vmul.f32 %v2243, %v2243
        %v2504 = vmul.f32 %v2244, %v2244
        %v2505 = vmul.f32 %v2245, %v2245
        %v2506 = vmul.f32 %v2246, %v2246
        %v2507 = vmul.f32 %v2247, %v2247
        %v2508 = vmul.f32 %v2248, %v2248
        %v2509 = vmul.f32 %v2249, %v2249
        %v2510 = vmul.f32 %v2250, %v2250
        %v2511 = vmul.f32 %v2251, %v2251
        %v2512 = vmul.f32 %v2252, %v2252
        %v2513 = vmul.f32 %v2253, %v2253
        %v2514 = vmul.f32 %v2254, %v2254
        %v2515 = vmul.f32 %v2255, %v2255
        %v2516 = vadd.f32 %v2498, %v2499
        %v2517 = vadd.f32 %v2516, %v2500
        %v2518 = vadd.f32 %v2517, %v2501
        %v2519 = vadd.f32 %v2518, %v2502
        %v2520 = vadd.f32 %v2519, %v2503
        %v2521 = vadd.f32 %v2520, %v2504
        %v2522 = vadd.f32 %v2521, %v2505
        %v2523 = vadd.f32 %v2522, %v2506
        %v2524 = vadd.f32 %v2523, %v2507
        %v2525 = vadd.f32 %v2524, %v2508
        %v2526 = vadd.f32 %v2525, %v2509
        %v2527 = vadd.f32 %v2526, %v2510
        %v2528 = vadd.f32 %v2527, %v2511
        %v2529 = vadd.f32 %v2528, %v2512
        %v2530 = vadd.f32 %v2529, %v2513
        %v2531 = vadd.f32 %v2530, %v2514
        %v2532 = vadd.f32 %v2531, %v2515
        %v2533 = vrot.slane %v2532, 4
        %v2534 = vadd.f32 %v2532, %v2533
        %v2535 = vrot.slane %v2534, 2
        %v2536 = vadd.f32 %v2534, %v2535
        %v2537 = vrot.slane %v2536, 1
        %v2538 = vadd.f32 %v2536, %v2537
        %vm2539 = vcmask 1040384
        %v2540 = vsel %vm2539, %v2497, %v2538
        %2541 = vst [vmem:[%s247] sm:$0x3] %v2540
        %p2542 = scmp.lt.s32.totalorder %s20, 1
        %s2543 = scalar_select %p2542, %s20, 1
        %s2544 = smul.addr %s2543, 24
        %s2545 = smul.addr %s2544, 8
        %s2546 = scalar_lea.vmem %s3, %s2545
        %p2547 = scmp.lt.s32.totalorder %s20, 1
        %s2548 = scalar_select %p2547, %s20, 1
        %s2549 = smul.addr %s2548, 24
        %s2550 = smul.addr %s2549, 8
        %s2551 = scalar_lea.vmem %s4, %s2550
        %s2552 = sand.u32 %s153, 1
        %s2553 = scalar_lea.sflag [#allocation3], %s2552
        %s2554 = sand.u32 %s153, 1
        %s2555 = smul.addr %s2554, 2
        %s2556 = scalar_lea.vmem [#allocation2], %s2555
        // Predicated region
        $region33: #{tpu_custom_call.1} parent=31 // pred_check
          %p2557 = pneg %p111
        $region34: #{tpu_custom_call.1} parent=31 // pred_check_branch
          %2559 = sbr.rel (%p2557) target = $region36
        $region35: #{tpu_custom_call.1} parent=31 // pred_region
          _
        $region36: #{tpu_custom_call.1} parent=31 // pred_fallthru
          _
        // Predicated region
        $region37: #{tpu_custom_call.1} parent=31 // pred_check
          %p2560 = pneg %p137
        $region38: #{tpu_custom_call.1} parent=31 // pred_check_branch
          %2562 = sbr.rel (%p2560) target = $region40
        $region39: #{tpu_custom_call.1} parent=31 // pred_region
          _
        $region40: #{tpu_custom_call.1} parent=31 // pred_fallthru
          _
        // Predicated region
        $region41: #{tpu_custom_call.1} parent=31 // pred_check
          %p2563 = pneg %p163
        $region42: #{tpu_custom_call.1} parent=31 // pred_check_branch
          %2565 = sbr.rel (%p2563) target = $region44
        $region43: #{tpu_custom_call.1} parent=31 // pred_region
          %s2567 = ssub.s32 32, 32
          %2568 = vsyncadd %s2553, %s2567
          %s2569 = smul.addr %s20, 32
          %s2570 = scalar_lea.hbm %s5, %s2569
          %s2572 = sshll.u32 %s2556, 4
          %s2573 = int_to_ptr.vmem [resolvable:$true] %s2572
          %2575 = dma.vmem_to_hbm [thread:$0]  %s2573, 32, %s2570, %s2553
        $region44: #{tpu_custom_call.1} parent=31 // pred_fallthru
          _
      $region32: #{tpu_custom_call.1} parent=5 // pred_fallthru
        _
      %p2576 = scmp.le.s32.totalorder 2, %s15
      // Predicated region
      $region45: #{tpu_custom_call.1} parent=5 // pred_check
        %p2577 = pneg %p2576
      $region46: #{tpu_custom_call.1} parent=5 // pred_check_branch
        %2579 = sbr.rel (%p2577) target = $region48
      $region47: #{tpu_custom_call.1} parent=5 // pred_region
        %s2580 = ssub.s32 %s15, 2
        // Predicated region
        $region49: #{tpu_custom_call.1} parent=47 // pred_check
          %p2581 = pneg %p117
        $region50: #{tpu_custom_call.1} parent=47 // pred_check_branch
          %2583 = sbr.rel (%p2581) target = $region52
        $region51: #{tpu_custom_call.1} parent=47 // pred_region
          %p2584 = scmp.lt.s32.totalorder %s21, 1
          %s2585 = scalar_select %p2584, %s21, 1
          %s2586 = smul.addr %s2585, 24
          %s2587 = smul.addr %s2586, 8
          %s2588 = scalar_lea.vmem %s3, %s2587
        $region52: #{tpu_custom_call.1} parent=47 // pred_fallthru
          _
        // Predicated region
        $region53: #{tpu_custom_call.1} parent=47 // pred_check
          %p2589 = pneg %p143
        $region54: #{tpu_custom_call.1} parent=47 // pred_check_branch
          %2591 = sbr.rel (%p2589) target = $region56
        $region55: #{tpu_custom_call.1} parent=47 // pred_region
          %p2592 = scmp.lt.s32.totalorder %s21, 1
          %s2593 = scalar_select %p2592, %s21, 1
          %s2594 = smul.addr %s2593, 24
          %s2595 = smul.addr %s2594, 8
          %s2596 = scalar_lea.vmem %s4, %s2595
        $region56: #{tpu_custom_call.1} parent=47 // pred_fallthru
          _
        // Predicated region
        $region57: #{tpu_custom_call.1} parent=47 // pred_check
          %p2597 = pneg %p169
        $region58: #{tpu_custom_call.1} parent=47 // pred_check_branch
          %2599 = sbr.rel (%p2597) target = $region60
        $region59: #{tpu_custom_call.1} parent=47 // pred_region
          %s2600 = sand.u32 %s154, 1
          %s2601 = scalar_lea.sflag [#allocation3], %s2600
          %s2602 = sand.u32 %s154, 1
          %s2603 = smul.addr %s2602, 2
          %s2604 = scalar_lea.vmem [#allocation2], %s2603
          %2605 = dma.done %s2601, 32
        $region60: #{tpu_custom_call.1} parent=47 // pred_fallthru
          _
      $region48: #{tpu_custom_call.1} parent=5 // pred_fallthru
        _
    $region6: #{tpu_custom_call.1} parent=1 // loop_footer
      %s19 = sadd.s32 1, %s15
    $region7: #{tpu_custom_call.1} parent=1 // loop_footer_branch
      %14 = sbr.rel target = $region3
    $region8: #{tpu_custom_call.1} parent=1 // loop_exit
      _
    %2606 = vsyncpa [#allocation3], 1
    %s2607 = scalar_lea.sflag [#allocation3], 1
    %2608 = vsyncpa %s2607, 1

</llo_original>
